<compile_context>
chip_gen: v7x
topology: tpu7x:2x2x1
jax: 0.10.0
libtpu: 0.0.40
codegen_flags: <defaults>
</compile_context>

<pallas_src>
import functools

import jax
import jax.numpy as jnp
from jax.experimental import pallas as pl
from jax.experimental.pallas import tpu as pltpu

LEAKY_SLOPE = 0.2
GN_EPS = 1e-5
NUM_GROUPS = 16


# ----------------------------- Pallas kernels -----------------------------

def _conv_gn_lrelu_kernel(patch_ref, w_ref, b_ref, gamma_ref, beta_ref,
                          mask_ref, mask_t_ref, o_ref, *, n_group_elems):
    # patch_ref: (1, P, CK2) bf16   w_ref: (CK2, C_pad) bf16
    # b/gamma/beta: (1, C_pad) f32  mask: (C_pad, G)  mask_t: (G, C_pad)
    # o_ref: (1, P, C_pad) bf16
    x = patch_ref[0]                                                    # (P, CK2)
    y = jnp.dot(x, w_ref[...], preferred_element_type=jnp.float32)
    y = y + b_ref[...]                                                  # (P, C_pad) f32

    # GroupNorm(16): group stats via mask matmuls (pad lanes masked out)
    s1 = jnp.sum(y, axis=0, keepdims=True)                              # (1, C_pad)
    s2 = jnp.sum(y * y, axis=0, keepdims=True)                          # (1, C_pad)
    gs1 = jnp.dot(s1, mask_ref[...], preferred_element_type=jnp.float32)    # (1, G)
    gs2 = jnp.dot(s2, mask_ref[...], preferred_element_type=jnp.float32)    # (1, G)
    mean_g = gs1 / n_group_elems
    var_g = gs2 / n_group_elems - mean_g * mean_g                       # biased var
    inv_g = jax.lax.rsqrt(var_g + GN_EPS)
    mean_c = jnp.dot(mean_g, mask_t_ref[...], preferred_element_type=jnp.float32)
    inv_c = jnp.dot(inv_g, mask_t_ref[...], preferred_element_type=jnp.float32)

    # folded affine: yn = y*scale + shift
    scale_c = inv_c * gamma_ref[...]
    shift_c = beta_ref[...] - mean_c * scale_c
    yn = y * scale_c + shift_c
    act = jnp.where(yn >= 0.0, yn, LEAKY_SLOPE * yn)
    o_ref[0] = act.astype(o_ref.dtype)


def _conv_gn_lrelu_final_kernel(patch_ref, w_ref, b_ref, gamma_ref, beta_ref,
                                mask_ref, mask_t_ref, wf_ref, bf_ref, o_ref,
                                *, n_group_elems):
    # Same as above, plus the fused final Conv2d(C, 1, k, 1, 0) whose single patch
    # is the whole (k x k x C) feature map.
    # wf_ref: (P, C_pad) f32   bf_ref: (1, 128) f32   o_ref: (1, 1, 128) f32
    x = patch_ref[0]
    y = jnp.dot(x, w_ref[...], preferred_element_type=jnp.float32)
    y = y + b_ref[...]

    s1 = jnp.sum(y, axis=0, keepdims=True)
    s2 = jnp.sum(y * y, axis=0, keepdims=True)
    gs1 = jnp.dot(s1, mask_ref[...], preferred_element_type=jnp.float32)
    gs2 = jnp.dot(s2, mask_ref[...], preferred_element_type=jnp.float32)
    mean_g = gs1 / n_group_elems
    var_g = gs2 / n_group_elems - mean_g * mean_g
    inv_g = jax.lax.rsqrt(var_g + GN_EPS)
    mean_c = jnp.dot(mean_g, mask_t_ref[...], preferred_element_type=jnp.float32)
    inv_c = jnp.dot(inv_g, mask_t_ref[...], preferred_element_type=jnp.float32)

    scale_c = inv_c * gamma_ref[...]
    shift_c = beta_ref[...] - mean_c * scale_c
    yn = y * scale_c + shift_c
    act = jnp.where(yn >= 0.0, yn, LEAKY_SLOPE * yn)                    # (P, C_pad) f32

    # fused final conv: full-map dot product (pad lanes of wf are zero)
    tot = jnp.sum(act * wf_ref[...], axis=0, keepdims=True)             # (1, C_pad)
    tot = jnp.sum(tot, axis=1, keepdims=True)                           # (1, 1)
    o_ref[0] = tot + bf_ref[...]                                        # broadcast to (1,128)


def _final_conv_kernel(patch_ref, w_ref, b_ref, o_ref):
    # Fallback (only used if the last hidden layer's spatial size != final kernel size).
    o_ref[0] = jnp.dot(patch_ref[0], w_ref[...],
                       preferred_element_type=jnp.float32) + b_ref[...]


# ------------------------------ JAX glue -----------------------------------

def _round_up(v, m):
    return ((v + m - 1) // m) * m


def _pad_last(a, target):
    pad = target - a.shape[-1]
    if pad == 0:
        return a
    return jnp.pad(a, [(0, 0)] * (a.ndim - 1) + [(0, pad)])


def _group_masks(c_out, c_pad):
    cs = c_out // NUM_GROUPS
    gidx = jnp.arange(c_out) // cs
    m = jax.nn.one_hot(gidx, NUM_GROUPS, dtype=jnp.float32)             # (C_out, G)
    m = jnp.pad(m, ((0, c_pad - c_out), (0, 0)))                        # pad rows -> 0
    return m, m.T


def _im2col_nhwc(x, k, s, p):
    """NHWC -> (N, Ho*Wo, k*k*C) patches, flattened in (kh, kw, c) order."""
    N, H, W, C = x.shape
    if p:
        x = jnp.pad(x, ((0, 0), (p, p), (p, p), (0, 0)))
    Ho = (H + 2 * p - k) // s + 1
    Wo = (W + 2 * p - k) // s + 1
    cols = []
    for kh in range(k):
        for kw in range(k):
            cols.append(x[:, kh:kh + (Ho - 1) * s + 1:s,
                             kw:kw + (Wo - 1) * s + 1:s, :])            # (N,Ho,Wo,C)
    patches = jnp.stack(cols, axis=3)                                   # (N,Ho,Wo,k*k,C)
    return patches.reshape(N, Ho * Wo, k * k * C), Ho, Wo


def _layer_constants(w, b, gamma, beta):
    C_out, C_in, k, _ = w.shape
    CK2 = k * k * C_in
    C_pad = _round_up(C_out, 128)
    # OIHW -> (kh, kw, c_in, c_out) -> (k*k*C_in, C_out), matching patch flatten order
    w2 = jnp.transpose(w, (2, 3, 1, 0)).reshape(CK2, C_out)
    w2 = _pad_last(w2, C_pad).astype(jnp.bfloat16)
    b_p = _pad_last(b.reshape(1, C_out).astype(jnp.float32), C_pad)
    g_p = _pad_last(gamma.reshape(1, C_out).astype(jnp.float32), C_pad)
    bt_p = _pad_last(beta.reshape(1, C_out).astype(jnp.float32), C_pad)
    mask, mask_t = _group_masks(C_out, C_pad)
    return C_out, CK2, C_pad, w2, b_p, g_p, bt_p, mask, mask_t


def _conv_gn_lrelu_layer(x, w, b, gamma, beta):
    """x: (N, H, W, C_in) -> (N, Ho, Wo, C_out) channel-last (bf16)."""
    N = x.shape[0]
    k = w.shape[-1]
    C_out, CK2, C_pad, w2, b_p, g_p, bt_p, mask, mask_t = _layer_constants(w, b, gamma, beta)
    patches, Ho, Wo = _im2col_nhwc(x, k, s=2, p=1)
    patches = patches.astype(jnp.bfloat16)
    P = Ho * Wo
    cs = C_out // NUM_GROUPS

    kernel = functools.partial(_conv_gn_lrelu_kernel, n_group_elems=float(P * cs))
    out = pl.pallas_call(
        kernel,
        out_shape=jax.ShapeDtypeStruct((N, P, C_pad), jnp.bfloat16),
        grid=(N,),
        in_specs=[
            pl.BlockSpec((1, P, CK2), lambda n: (n, 0, 0)),
            pl.BlockSpec((CK2, C_pad), lambda n: (0, 0)),
            pl.BlockSpec((1, C_pad), lambda n: (0, 0)),
            pl.BlockSpec((1, C_pad), lambda n: (0, 0)),
            pl.BlockSpec((1, C_pad), lambda n: (0, 0)),
            pl.BlockSpec((C_pad, NUM_GROUPS), lambda n: (0, 0)),
            pl.BlockSpec((NUM_GROUPS, C_pad), lambda n: (0, 0)),
        ],
        out_specs=pl.BlockSpec((1, P, C_pad), lambda n: (n, 0, 0)),
        compiler_params=pltpu.CompilerParams(dimension_semantics=("parallel",)),
    )(patches, w2, b_p, g_p, bt_p, mask, mask_t)

    return out[:, :, :C_out].reshape(N, Ho, Wo, C_out)                  # channel-last


def _conv_gn_lrelu_final_layer(x, w, b, gamma, beta, wf, bf):
    """Last hidden layer fused with the final Conv2d(C,1,kf,1,0). Returns (N,1,1,1)."""
    N = x.shape[0]
    k = w.shape[-1]
    C_out, CK2, C_pad, w2, b_p, g_p, bt_p, mask, mask_t = _layer_constants(w, b, gamma, beta)
    patches, Ho, Wo = _im2col_nhwc(x, k, s=2, p=1)
    patches = patches.astype(jnp.bfloat16)
    P = Ho * Wo
    cs = C_out // NUM_GROUPS

    kf = wf.shape[-1]
    # wf: (1, C_out, kf, kf) -> (kf*kf, C_out) with row index = h*kf + w (matches P order)
    wf2d = jnp.transpose(wf[0], (1, 2, 0)).reshape(kf * kf, C_out).astype(jnp.float32)
    wf2d = _pad_last(wf2d, C_pad)                                       # (P, C_pad)
    bf_row = jnp.full((1, 128), bf.reshape(())[()], dtype=jnp.float32)

    kernel = functools.partial(_conv_gn_lrelu_final_kernel, n_group_elems=float(P * cs))
    out = pl.pallas_call(
        kernel,
        out_shape=jax.ShapeDtypeStruct((N, 1, 128), jnp.float32),
        grid=(N,),
        in_specs=[
            pl.BlockSpec((1, P, CK2), lambda n: (n, 0, 0)),
            pl.BlockSpec((CK2, C_pad), lambda n: (0, 0)),
            pl.BlockSpec((1, C_pad), lambda n: (0, 0)),
            pl.BlockSpec((1, C_pad), lambda n: (0, 0)),
            pl.BlockSpec((1, C_pad), lambda n: (0, 0)),
            pl.BlockSpec((C_pad, NUM_GROUPS), lambda n: (0, 0)),
            pl.BlockSpec((NUM_GROUPS, C_pad), lambda n: (0, 0)),
            pl.BlockSpec((P, C_pad), lambda n: (0, 0)),
            pl.BlockSpec((1, 128), lambda n: (0, 0)),
        ],
        out_specs=pl.BlockSpec((1, 1, 128), lambda n: (n, 0, 0)),
        compiler_params=pltpu.CompilerParams(dimension_semantics=("parallel",)),
    )(patches, w2, b_p, g_p, bt_p, mask, mask_t, wf2d, bf_row)

    return out[:, :, 0].reshape(N, 1, 1, 1)


def _final_conv_layer(x, w, b):
    """Fallback generic final conv (NHWC in, NCHW out). Not used for the default shapes."""
    N = x.shape[0]
    C_out, C_in, k, _ = w.shape
    patches, Ho, Wo = _im2col_nhwc(x, k, s=1, p=0)
    patches = patches.astype(jnp.bfloat16)
    P = Ho * Wo
    CK2 = k * k * C_in
    C_pad = _round_up(C_out, 128)
    w2 = jnp.transpose(w, (2, 3, 1, 0)).reshape(CK2, C_out)
    w2 = _pad_last(w2, C_pad).astype(jnp.bfloat16)
    b_p = _pad_last(b.reshape(1, C_out).astype(jnp.float32), C_pad)

    out = pl.pallas_call(
        _final_conv_kernel,
        out_shape=jax.ShapeDtypeStruct((N, P, C_pad), jnp.float32),
        grid=(N,),
        in_specs=[
            pl.BlockSpec((1, P, CK2), lambda n: (n, 0, 0)),
            pl.BlockSpec((CK2, C_pad), lambda n: (0, 0)),
            pl.BlockSpec((1, C_pad), lambda n: (0, 0)),
        ],
        out_specs=pl.BlockSpec((1, P, C_pad), lambda n: (n, 0, 0)),
        compiler_params=pltpu.CompilerParams(dimension_semantics=("parallel",)),
    )(patches, w2, b_p)
    return out[:, :, :C_out].reshape(N, Ho, Wo, C_out).transpose(0, 3, 1, 2)


def discriminator_forward(x, conv_params, gn_params):
    """x: (N, input_dim, H, W) NCHW. Returns (N, 1, Ho, Wo) (== (N,1,1,1) for the default)."""
    x = jnp.transpose(x, (0, 2, 3, 1)).astype(jnp.float32)              # NHWC, stay channel-last
    wf, bf = conv_params[-1]
    kf = wf.shape[-1]
    n_hidden = len(gn_params)
    for li in range(n_hidden):
        w, b = conv_params[li]
        gamma, beta = gn_params[li]
        H, W = x.shape[1], x.shape[2]
        Ho = (H + 2 - 4) // 2 + 1
        Wo = (W + 2 - 4) // 2 + 1
        if li == n_hidden - 1 and Ho == kf and Wo == kf:
            return _conv_gn_lrelu_final_layer(x, w, b, gamma, beta, wf, bf)
        x = _conv_gn_lrelu_layer(x, w, b, gamma, beta)
    return _final_conv_layer(x, wf, bf)


# --------------------------- pure-JAX reference -----------------------------
# Mirrors the kernel's numerics (bf16 matmul inputs, f32 accumulation & epilogue).

def _ref_forward(x, conv_params, gn_params):
    for (w, b), (gamma, beta) in zip(conv_params[:-1], gn_params):
        y = jax.lax.conv_general_dilated(
            x.astype(jnp.bfloat16), w.astype(jnp.bfloat16),
            window_strides=(2, 2), padding=((1, 1), (1, 1)),
            dimension_numbers=("NCHW", "OIHW", "NCHW"),
            preferred_element_type=jnp.float32) + b.reshape(1, -1, 1, 1)
        N, C, H, W = y.shape
        yg = y.reshape(N, NUM_GROUPS, -1)
        mean = yg.mean(axis=-1, keepdims=True)
        var = yg.var(axis=-1, keepdims=True)
        yg = (yg - mean) / jnp.sqrt(var + GN_EPS)
        y = yg.reshape(N, C, H, W) * gamma.reshape(1, -1, 1, 1) + beta.reshape(1, -1, 1, 1)
        x = jnp.where(y >= 0, y, LEAKY_SLOPE * y)
    w, b = conv_params[-1]
    return jax.lax.conv_general_dilated(
        x.astype(jnp.bfloat16), w.astype(jnp.bfloat16),
        window_strides=(1, 1), padding=((0, 0), (0, 0)),
        dimension_numbers=("NCHW", "OIHW", "NCHW"),
        preferred_element_type=jnp.float32) + b.reshape(1, -1, 1, 1)


# ---------------------------------- main ------------------------------------

if __name__ == "__main__":
    key = jax.random.PRNGKey(0)

    input_dim = 4
    hidden_dims = [32, 64]          # GroupNorm(16, C) requires C % 16 == 0
    N, H, W = 2, 16, 16
    for c in hidden_dims:
        assert c % NUM_GROUPS == 0

    key, xk = jax.random.split(key)
    x = jax.random.normal(xk, (N, input_dim, H, W), dtype=jnp.float32)

    # Deterministic parameter init (synthetic, not a checkpoint).
    conv_params = []
    gn_params = []
    in_ch = input_dim
    for out_ch in hidden_dims:
        key, kw, kb, kg, kbt = jax.random.split(key, 5)
        w = 0.05 * jax.random.normal(kw, (out_ch, in_ch, 4, 4), dtype=jnp.float32)
        b = 0.05 * jax.random.normal(kb, (out_ch,), dtype=jnp.float32)
        gamma = 1.0 + 0.1 * jax.random.normal(kg, (out_ch,), dtype=jnp.float32)
        beta = 0.1 * jax.random.normal(kbt, (out_ch,), dtype=jnp.float32)
        conv_params.append((w, b))
        gn_params.append((gamma, beta))
        in_ch = out_ch
    key, kw, kb = jax.random.split(key, 3)
    w = 0.05 * jax.random.normal(kw, (1, hidden_dims[-1], 4, 4), dtype=jnp.float32)
    b = 0.05 * jax.random.normal(kb, (1,), dtype=jnp.float32)
    conv_params.append((w, b))

    fwd = jax.jit(discriminator_forward)
    out = jax.block_until_ready(fwd(x, conv_params, gn_params))

    ref = jax.block_until_ready(_ref_forward(x, conv_params, gn_params))
    assert out.shape == ref.shape == (N, 1, 1, 1), (out.shape, ref.shape)
    assert jnp.allclose(out, ref, rtol=2e-3, atol=2e-3), (
        "mismatch", float(jnp.max(jnp.abs(out - ref))))

    print("KERNEL_OK")
</pallas_src>

<mosaic_0001>
module attributes {stable_mosaic.version = 11 : i64} {
  func.func @_conv_gn_lrelu_kernel(%arg0: i32, %arg1: memref<1x64x64xbf16, #tpu.memory_space<vmem>>, %arg2: memref<64x128xbf16, #tpu.memory_space<vmem>>, %arg3: memref<1x128xf32, #tpu.memory_space<vmem>>, %arg4: memref<1x128xf32, #tpu.memory_space<vmem>>, %arg5: memref<1x128xf32, #tpu.memory_space<vmem>>, %arg6: memref<128x16xf32, #tpu.memory_space<vmem>>, %arg7: memref<16x128xf32, #tpu.memory_space<vmem>>, %arg8: memref<1x64x128xbf16, #tpu.memory_space<vmem>>) attributes {dimension_semantics = [#tpu.dimension_semantics<parallel>], iteration_bounds = array<i64: 2>, scalar_prefetch = 0 : i64, scratch_operands = 0 : i64, tpu.core_type = #tpu.core_type<tc>, window_params = [{transform_indices = @transform_0, window_bounds = array<i64: 1, 64, 64>}, {pipeline_mode = #tpu.pipeline_mode<synchronous>, transform_indices = @transform_1, window_bounds = array<i64: 64, 128>}, {pipeline_mode = #tpu.pipeline_mode<synchronous>, transform_indices = @transform_2, window_bounds = array<i64: 1, 128>}, {pipeline_mode = #tpu.pipeline_mode<synchronous>, transform_indices = @transform_3, window_bounds = array<i64: 1, 128>}, {pipeline_mode = #tpu.pipeline_mode<synchronous>, transform_indices = @transform_4, window_bounds = array<i64: 1, 128>}, {pipeline_mode = #tpu.pipeline_mode<synchronous>, transform_indices = @transform_5, window_bounds = array<i64: 128, 16>}, {pipeline_mode = #tpu.pipeline_mode<synchronous>, transform_indices = @transform_6, window_bounds = array<i64: 16, 128>}, {transform_indices = @transform_7, window_bounds = array<i64: 1, 64, 128>}]} {
    %c0 = arith.constant 0 : index
    %c0_0 = arith.constant 0 : index
    %c0_1 = arith.constant 0 : index
    %0 = vector.load %arg1[%c0, %c0_0, %c0_1] : memref<1x64x64xbf16, #tpu.memory_space<vmem>>, vector<1x64x64xbf16>
    %1 = vector.shape_cast %0 : vector<1x64x64xbf16> to vector<64x64xbf16>
    %c0_2 = arith.constant 0 : index
    %c0_3 = arith.constant 0 : index
    %2 = vector.load %arg2[%c0_2, %c0_3] : memref<64x128xbf16, #tpu.memory_space<vmem>>, vector<64x128xbf16>
    %cst = arith.constant dense<0.000000e+00> : vector<64x128xf32>
    %3 = tpu.matmul %1, %2, %cst {dimension_numbers = #tpu.dot_dimension_numbers<[1], [0], [0], [1], [0, 0, 1, 1], [], []>} : vector<64x64xbf16>, vector<64x128xbf16>, vector<64x128xf32> -> vector<64x128xf32>
    %c0_4 = arith.constant 0 : index
    %c0_5 = arith.constant 0 : index
    %4 = vector.load %arg3[%c0_4, %c0_5] : memref<1x128xf32, #tpu.memory_space<vmem>>, vector<1x128xf32>
    %5 = vector.broadcast %4 : vector<1x128xf32> to vector<64x128xf32>
    %6 = arith.addf %3, %5 : vector<64x128xf32>
    %cst_6 = arith.constant dense<0.000000e+00> : vector<128xf32>
    %7 = vector.multi_reduction <add>, %6, %cst_6 [0] : vector<64x128xf32> to vector<128xf32>
    %8 = vector.shape_cast %7 : vector<128xf32> to vector<1x128xf32>
    %9 = arith.mulf %6, %6 : vector<64x128xf32>
    %cst_7 = arith.constant dense<0.000000e+00> : vector<128xf32>
    %10 = vector.multi_reduction <add>, %9, %cst_7 [0] : vector<64x128xf32> to vector<128xf32>
    %11 = vector.shape_cast %10 : vector<128xf32> to vector<1x128xf32>
    %c0_8 = arith.constant 0 : index
    %c0_9 = arith.constant 0 : index
    %12 = vector.load %arg6[%c0_8, %c0_9] : memref<128x16xf32, #tpu.memory_space<vmem>>, vector<128x16xf32>
    %cst_10 = arith.constant dense<0.000000e+00> : vector<1x16xf32>
    %13 = tpu.matmul %8, %12, %cst_10 {dimension_numbers = #tpu.dot_dimension_numbers<[1], [0], [0], [1], [0, 0, 1, 1], [], []>} : vector<1x128xf32>, vector<128x16xf32>, vector<1x16xf32> -> vector<1x16xf32>
    %c0_11 = arith.constant 0 : index
    %c0_12 = arith.constant 0 : index
    %14 = vector.load %arg6[%c0_11, %c0_12] : memref<128x16xf32, #tpu.memory_space<vmem>>, vector<128x16xf32>
    %cst_13 = arith.constant dense<0.000000e+00> : vector<1x16xf32>
    %15 = tpu.matmul %11, %14, %cst_13 {dimension_numbers = #tpu.dot_dimension_numbers<[1], [0], [0], [1], [0, 0, 1, 1], [], []>} : vector<1x128xf32>, vector<128x16xf32>, vector<1x16xf32> -> vector<1x16xf32>
    %cst_14 = arith.constant 1.280000e+02 : f32
    %16 = vector.broadcast %cst_14 : f32 to vector<1x16xf32>
    %17 = arith.divf %13, %16 : vector<1x16xf32>
    %cst_15 = arith.constant 1.280000e+02 : f32
    %18 = vector.broadcast %cst_15 : f32 to vector<1x16xf32>
    %19 = arith.divf %15, %18 : vector<1x16xf32>
    %20 = arith.mulf %17, %17 : vector<1x16xf32>
    %21 = arith.subf %19, %20 : vector<1x16xf32>
    %cst_16 = arith.constant 9.99999974E-6 : f32
    %22 = vector.broadcast %cst_16 : f32 to vector<1x16xf32>
    %23 = arith.addf %21, %22 : vector<1x16xf32>
    %24 = math.rsqrt %23 : vector<1x16xf32>
    %c0_17 = arith.constant 0 : index
    %c0_18 = arith.constant 0 : index
    %25 = vector.load %arg7[%c0_17, %c0_18] : memref<16x128xf32, #tpu.memory_space<vmem>>, vector<16x128xf32>
    %cst_19 = arith.constant dense<0.000000e+00> : vector<1x128xf32>
    %26 = tpu.matmul %17, %25, %cst_19 {dimension_numbers = #tpu.dot_dimension_numbers<[1], [0], [0], [1], [0, 0, 1, 1], [], []>} : vector<1x16xf32>, vector<16x128xf32>, vector<1x128xf32> -> vector<1x128xf32>
    %c0_20 = arith.constant 0 : index
    %c0_21 = arith.constant 0 : index
    %27 = vector.load %arg7[%c0_20, %c0_21] : memref<16x128xf32, #tpu.memory_space<vmem>>, vector<16x128xf32>
    %cst_22 = arith.constant dense<0.000000e+00> : vector<1x128xf32>
    %28 = tpu.matmul %24, %27, %cst_22 {dimension_numbers = #tpu.dot_dimension_numbers<[1], [0], [0], [1], [0, 0, 1, 1], [], []>} : vector<1x16xf32>, vector<16x128xf32>, vector<1x128xf32> -> vector<1x128xf32>
    %c0_23 = arith.constant 0 : index
    %c0_24 = arith.constant 0 : index
    %29 = vector.load %arg4[%c0_23, %c0_24] : memref<1x128xf32, #tpu.memory_space<vmem>>, vector<1x128xf32>
    %30 = arith.mulf %28, %29 : vector<1x128xf32>
    %c0_25 = arith.constant 0 : index
    %c0_26 = arith.constant 0 : index
    %31 = vector.load %arg5[%c0_25, %c0_26] : memref<1x128xf32, #tpu.memory_space<vmem>>, vector<1x128xf32>
    %32 = arith.mulf %26, %30 : vector<1x128xf32>
    %33 = arith.subf %31, %32 : vector<1x128xf32>
    %34 = vector.broadcast %30 : vector<1x128xf32> to vector<64x128xf32>
    %35 = arith.mulf %6, %34 : vector<64x128xf32>
    %36 = vector.broadcast %33 : vector<1x128xf32> to vector<64x128xf32>
    %37 = arith.addf %35, %36 : vector<64x128xf32>
    %cst_27 = arith.constant 0.000000e+00 : f32
    %38 = vector.broadcast %cst_27 : f32 to vector<64x128xf32>
    %39 = arith.cmpf oge, %37, %38 : vector<64x128xf32>
    %cst_28 = arith.constant 2.000000e-01 : f32
    %40 = vector.broadcast %cst_28 : f32 to vector<64x128xf32>
    %41 = arith.mulf %40, %37 : vector<64x128xf32>
    %42 = arith.select %39, %37, %41 : vector<64x128xi1>, vector<64x128xf32>
    %43 = arith.truncf %42 : vector<64x128xf32> to vector<64x128xbf16>
    %c0_29 = arith.constant 0 : index
    %c0_30 = arith.constant 0 : index
    %c0_31 = arith.constant 0 : index
    %44 = vector.load %arg8[%c0_29, %c0_30, %c0_31] : memref<1x64x128xbf16, #tpu.memory_space<vmem>>, vector<1x64x128xbf16>
    %45 = vector.shape_cast %44 : vector<1x64x128xbf16> to vector<64x128xbf16>
    %46 = vector.shape_cast %43 : vector<64x128xbf16> to vector<1x64x128xbf16>
    tpu.vector_store %arg8[%c0_29, %c0_30, %c0_31], %46 {strides = array<i32>} : memref<1x64x128xbf16, #tpu.memory_space<vmem>>, vector<1x64x128xbf16>,
    return
  }
  func.func @transform_0(%arg0: i32) -> (i32, i32, i32) {
    %c0_i32 = arith.constant 0 : i32
    %c0_i32_0 = arith.constant 0 : i32
    %c0_i32_1 = arith.constant 0 : i32
    return %arg0, %c0_i32, %c0_i32_0 : i32, i32, i32
  }
  func.func @transform_1(%arg0: i32) -> (i32, i32) {
    %c0_i32 = arith.constant 0 : i32
    %c0_i32_0 = arith.constant 0 : i32
    %c0_i32_1 = arith.constant 0 : i32
    return %c0_i32, %c0_i32_0 : i32, i32
  }
  func.func @transform_2(%arg0: i32) -> (i32, i32) {
    %c0_i32 = arith.constant 0 : i32
    %c0_i32_0 = arith.constant 0 : i32
    %c0_i32_1 = arith.constant 0 : i32
    return %c0_i32, %c0_i32_0 : i32, i32
  }
  func.func @transform_3(%arg0: i32) -> (i32, i32) {
    %c0_i32 = arith.constant 0 : i32
    %c0_i32_0 = arith.constant 0 : i32
    %c0_i32_1 = arith.constant 0 : i32
    return %c0_i32, %c0_i32_0 : i32, i32
  }
  func.func @transform_4(%arg0: i32) -> (i32, i32) {
    %c0_i32 = arith.constant 0 : i32
    %c0_i32_0 = arith.constant 0 : i32
    %c0_i32_1 = arith.constant 0 : i32
    return %c0_i32, %c0_i32_0 : i32, i32
  }
  func.func @transform_5(%arg0: i32) -> (i32, i32) {
    %c0_i32 = arith.constant 0 : i32
    %c0_i32_0 = arith.constant 0 : i32
    %c0_i32_1 = arith.constant 0 : i32
    return %c0_i32, %c0_i32_0 : i32, i32
  }
  func.func @transform_6(%arg0: i32) -> (i32, i32) {
    %c0_i32 = arith.constant 0 : i32
    %c0_i32_0 = arith.constant 0 : i32
    %c0_i32_1 = arith.constant 0 : i32
    return %c0_i32, %c0_i32_0 : i32, i32
  }
  func.func @transform_7(%arg0: i32) -> (i32, i32, i32) {
    %c0_i32 = arith.constant 0 : i32
    %c0_i32_0 = arith.constant 0 : i32
    %c0_i32_1 = arith.constant 0 : i32
    return %arg0, %c0_i32, %c0_i32_0 : i32, i32, i32
  }
}

module attributes {stable_mosaic.version = 11 : i64} {
  func.func @_conv_gn_lrelu_final_kernel(%arg0: i32, %arg1: memref<1x16x512xbf16, #tpu.memory_space<vmem>>, %arg2: memref<512x128xbf16, #tpu.memory_space<vmem>>, %arg3: memref<1x128xf32, #tpu.memory_space<vmem>>, %arg4: memref<1x128xf32, #tpu.memory_space<vmem>>, %arg5: memref<1x128xf32, #tpu.memory_space<vmem>>, %arg6: memref<128x16xf32, #tpu.memory_space<vmem>>, %arg7: memref<16x128xf32, #tpu.memory_space<vmem>>, %arg8: memref<16x128xf32, #tpu.memory_space<vmem>>, %arg9: memref<1x128xf32, #tpu.memory_space<vmem>>, %arg10: memref<1x1x128xf32, #tpu.memory_space<vmem>>) attributes {dimension_semantics = [#tpu.dimension_semantics<parallel>], iteration_bounds = array<i64: 2>, scalar_prefetch = 0 : i64, scratch_operands = 0 : i64, tpu.core_type = #tpu.core_type<tc>, window_params = [{transform_indices = @transform_0, window_bounds = array<i64: 1, 16, 512>}, {pipeline_mode = #tpu.pipeline_mode<synchronous>, transform_indices = @transform_1, window_bounds = array<i64: 512, 128>}, {pipeline_mode = #tpu.pipeline_mode<synchronous>, transform_indices = @transform_2, window_bounds = array<i64: 1, 128>}, {pipeline_mode = #tpu.pipeline_mode<synchronous>, transform_indices = @transform_3, window_bounds = array<i64: 1, 128>}, {pipeline_mode = #tpu.pipeline_mode<synchronous>, transform_indices = @transform_4, window_bounds = array<i64: 1, 128>}, {pipeline_mode = #tpu.pipeline_mode<synchronous>, transform_indices = @transform_5, window_bounds = array<i64: 128, 16>}, {pipeline_mode = #tpu.pipeline_mode<synchronous>, transform_indices = @transform_6, window_bounds = array<i64: 16, 128>}, {pipeline_mode = #tpu.pipeline_mode<synchronous>, transform_indices = @transform_7, window_bounds = array<i64: 16, 128>}, {pipeline_mode = #tpu.pipeline_mode<synchronous>, transform_indices = @transform_8, window_bounds = array<i64: 1, 128>}, {transform_indices = @transform_9, window_bounds = array<i64: 1, 1, 128>}]} {
    %c0 = arith.constant 0 : index
    %c0_0 = arith.constant 0 : index
    %c0_1 = arith.constant 0 : index
    %0 = vector.load %arg1[%c0, %c0_0, %c0_1] : memref<1x16x512xbf16, #tpu.memory_space<vmem>>, vector<1x16x512xbf16>
    %1 = vector.shape_cast %0 : vector<1x16x512xbf16> to vector<16x512xbf16>
    %c0_2 = arith.constant 0 : index
    %c0_3 = arith.constant 0 : index
    %2 = vector.load %arg2[%c0_2, %c0_3] : memref<512x128xbf16, #tpu.memory_space<vmem>>, vector<512x128xbf16>
    %cst = arith.constant dense<0.000000e+00> : vector<16x128xf32>
    %3 = tpu.matmul %1, %2, %cst {dimension_numbers = #tpu.dot_dimension_numbers<[1], [0], [0], [1], [0, 0, 1, 1], [], []>} : vector<16x512xbf16>, vector<512x128xbf16>, vector<16x128xf32> -> vector<16x128xf32>
    %c0_4 = arith.constant 0 : index
    %c0_5 = arith.constant 0 : index
    %4 = vector.load %arg3[%c0_4, %c0_5] : memref<1x128xf32, #tpu.memory_space<vmem>>, vector<1x128xf32>
    %5 = vector.broadcast %4 : vector<1x128xf32> to vector<16x128xf32>
    %6 = arith.addf %3, %5 : vector<16x128xf32>
    %cst_6 = arith.constant dense<0.000000e+00> : vector<128xf32>
    %7 = vector.multi_reduction <add>, %6, %cst_6 [0] : vector<16x128xf32> to vector<128xf32>
    %8 = vector.shape_cast %7 : vector<128xf32> to vector<1x128xf32>
    %9 = arith.mulf %6, %6 : vector<16x128xf32>
    %cst_7 = arith.constant dense<0.000000e+00> : vector<128xf32>
    %10 = vector.multi_reduction <add>, %9, %cst_7 [0] : vector<16x128xf32> to vector<128xf32>
    %11 = vector.shape_cast %10 : vector<128xf32> to vector<1x128xf32>
    %c0_8 = arith.constant 0 : index
    %c0_9 = arith.constant 0 : index
    %12 = vector.load %arg6[%c0_8, %c0_9] : memref<128x16xf32, #tpu.memory_space<vmem>>, vector<128x16xf32>
    %cst_10 = arith.constant dense<0.000000e+00> : vector<1x16xf32>
    %13 = tpu.matmul %8, %12, %cst_10 {dimension_numbers = #tpu.dot_dimension_numbers<[1], [0], [0], [1], [0, 0, 1, 1], [], []>} : vector<1x128xf32>, vector<128x16xf32>, vector<1x16xf32> -> vector<1x16xf32>
    %c0_11 = arith.constant 0 : index
    %c0_12 = arith.constant 0 : index
    %14 = vector.load %arg6[%c0_11, %c0_12] : memref<128x16xf32, #tpu.memory_space<vmem>>, vector<128x16xf32>
    %cst_13 = arith.constant dense<0.000000e+00> : vector<1x16xf32>
    %15 = tpu.matmul %11, %14, %cst_13 {dimension_numbers = #tpu.dot_dimension_numbers<[1], [0], [0], [1], [0, 0, 1, 1], [], []>} : vector<1x128xf32>, vector<128x16xf32>, vector<1x16xf32> -> vector<1x16xf32>
    %cst_14 = arith.constant 6.400000e+01 : f32
    %16 = vector.broadcast %cst_14 : f32 to vector<1x16xf32>
    %17 = arith.divf %13, %16 : vector<1x16xf32>
    %cst_15 = arith.constant 6.400000e+01 : f32
    %18 = vector.broadcast %cst_15 : f32 to vector<1x16xf32>
    %19 = arith.divf %15, %18 : vector<1x16xf32>
    %20 = arith.mulf %17, %17 : vector<1x16xf32>
    %21 = arith.subf %19, %20 : vector<1x16xf32>
    %cst_16 = arith.constant 9.99999974E-6 : f32
    %22 = vector.broadcast %cst_16 : f32 to vector<1x16xf32>
    %23 = arith.addf %21, %22 : vector<1x16xf32>
    %24 = math.rsqrt %23 : vector<1x16xf32>
    %c0_17 = arith.constant 0 : index
    %c0_18 = arith.constant 0 : index
    %25 = vector.load %arg7[%c0_17, %c0_18] : memref<16x128xf32, #tpu.memory_space<vmem>>, vector<16x128xf32>
    %cst_19 = arith.constant dense<0.000000e+00> : vector<1x128xf32>
    %26 = tpu.matmul %17, %25, %cst_19 {dimension_numbers = #tpu.dot_dimension_numbers<[1], [0], [0], [1], [0, 0, 1, 1], [], []>} : vector<1x16xf32>, vector<16x128xf32>, vector<1x128xf32> -> vector<1x128xf32>
    %c0_20 = arith.constant 0 : index
    %c0_21 = arith.constant 0 : index
    %27 = vector.load %arg7[%c0_20, %c0_21] : memref<16x128xf32, #tpu.memory_space<vmem>>, vector<16x128xf32>
    %cst_22 = arith.constant dense<0.000000e+00> : vector<1x128xf32>
    %28 = tpu.matmul %24, %27, %cst_22 {dimension_numbers = #tpu.dot_dimension_numbers<[1], [0], [0], [1], [0, 0, 1, 1], [], []>} : vector<1x16xf32>, vector<16x128xf32>, vector<1x128xf32> -> vector<1x128xf32>
    %c0_23 = arith.constant 0 : index
    %c0_24 = arith.constant 0 : index
    %29 = vector.load %arg4[%c0_23, %c0_24] : memref<1x128xf32, #tpu.memory_space<vmem>>, vector<1x128xf32>
    %30 = arith.mulf %28, %29 : vector<1x128xf32>
    %c0_25 = arith.constant 0 : index
    %c0_26 = arith.constant 0 : index
    %31 = vector.load %arg5[%c0_25, %c0_26] : memref<1x128xf32, #tpu.memory_space<vmem>>, vector<1x128xf32>
    %32 = arith.mulf %26, %30 : vector<1x128xf32>
    %33 = arith.subf %31, %32 : vector<1x128xf32>
    %34 = vector.broadcast %30 : vector<1x128xf32> to vector<16x128xf32>
    %35 = arith.mulf %6, %34 : vector<16x128xf32>
    %36 = vector.broadcast %33 : vector<1x128xf32> to vector<16x128xf32>
    %37 = arith.addf %35, %36 : vector<16x128xf32>
    %cst_27 = arith.constant 0.000000e+00 : f32
    %38 = vector.broadcast %cst_27 : f32 to vector<16x128xf32>
    %39 = arith.cmpf oge, %37, %38 : vector<16x128xf32>
    %cst_28 = arith.constant 2.000000e-01 : f32
    %40 = vector.broadcast %cst_28 : f32 to vector<16x128xf32>
    %41 = arith.mulf %40, %37 : vector<16x128xf32>
    %42 = arith.select %39, %37, %41 : vector<16x128xi1>, vector<16x128xf32>
    %c0_29 = arith.constant 0 : index
    %c0_30 = arith.constant 0 : index
    %43 = vector.load %arg8[%c0_29, %c0_30] : memref<16x128xf32, #tpu.memory_space<vmem>>, vector<16x128xf32>
    %44 = arith.mulf %42, %43 : vector<16x128xf32>
    %cst_31 = arith.constant dense<0.000000e+00> : vector<128xf32>
    %45 = vector.multi_reduction <add>, %44, %cst_31 [0] : vector<16x128xf32> to vector<128xf32>
    %46 = vector.shape_cast %45 : vector<128xf32> to vector<1x128xf32>
    %cst_32 = arith.constant dense<0.000000e+00> : vector<1xf32>
    %47 = vector.multi_reduction <add>, %46, %cst_32 [1] : vector<1x128xf32> to vector<1xf32>
    %48 = vector.shape_cast %47 : vector<1xf32> to vector<1x1xf32>
    %c0_33 = arith.constant 0 : index
    %c0_34 = arith.constant 0 : index
    %49 = vector.load %arg9[%c0_33, %c0_34] : memref<1x128xf32, #tpu.memory_space<vmem>>, vector<1x128xf32>
    %50 = vector.broadcast %48 : vector<1x1xf32> to vector<1x128xf32>
    %51 = arith.addf %50, %49 : vector<1x128xf32>
    %c0_35 = arith.constant 0 : index
    %c0_36 = arith.constant 0 : index
    %c0_37 = arith.constant 0 : index
    %52 = vector.load %arg10[%c0_35, %c0_36, %c0_37] : memref<1x1x128xf32, #tpu.memory_space<vmem>>, vector<1x1x128xf32>
    %53 = vector.shape_cast %52 : vector<1x1x128xf32> to vector<1x128xf32>
    %54 = vector.shape_cast %51 : vector<1x128xf32> to vector<1x1x128xf32>
    tpu.vector_store %arg10[%c0_35, %c0_36, %c0_37], %54 {strides = array<i32>} : memref<1x1x128xf32, #tpu.memory_space<vmem>>, vector<1x1x128xf32>,
    return
  }
  func.func @transform_0(%arg0: i32) -> (i32, i32, i32) {
    %c0_i32 = arith.constant 0 : i32
    %c0_i32_0 = arith.constant 0 : i32
    %c0_i32_1 = arith.constant 0 : i32
    return %arg0, %c0_i32, %c0_i32_0 : i32, i32, i32
  }
  func.func @transform_1(%arg0: i32) -> (i32, i32) {
    %c0_i32 = arith.constant 0 : i32
    %c0_i32_0 = arith.constant 0 : i32
    %c0_i32_1 = arith.constant 0 : i32
    return %c0_i32, %c0_i32_0 : i32, i32
  }
  func.func @transform_2(%arg0: i32) -> (i32, i32) {
    %c0_i32 = arith.constant 0 : i32
    %c0_i32_0 = arith.constant 0 : i32
    %c0_i32_1 = arith.constant 0 : i32
    return %c0_i32, %c0_i32_0 : i32, i32
  }
  func.func @transform_3(%arg0: i32) -> (i32, i32) {
    %c0_i32 = arith.constant 0 : i32
    %c0_i32_0 = arith.constant 0 : i32
    %c0_i32_1 = arith.constant 0 : i32
    return %c0_i32, %c0_i32_0 : i32, i32
  }
  func.func @transform_4(%arg0: i32) -> (i32, i32) {
    %c0_i32 = arith.constant 0 : i32
    %c0_i32_0 = arith.constant 0 : i32
    %c0_i32_1 = arith.constant 0 : i32
    return %c0_i32, %c0_i32_0 : i32, i32
  }
  func.func @transform_5(%arg0: i32) -> (i32, i32) {
    %c0_i32 = arith.constant 0 : i32
    %c0_i32_0 = arith.constant 0 : i32
    %c0_i32_1 = arith.constant 0 : i32
    return %c0_i32, %c0_i32_0 : i32, i32
  }
  func.func @transform_6(%arg0: i32) -> (i32, i32) {
    %c0_i32 = arith.constant 0 : i32
    %c0_i32_0 = arith.constant 0 : i32
    %c0_i32_1 = arith.constant 0 : i32
    return %c0_i32, %c0_i32_0 : i32, i32
  }
  func.func @transform_7(%arg0: i32) -> (i32, i32) {
    %c0_i32 = arith.constant 0 : i32
    %c0_i32_0 = arith.constant 0 : i32
    %c0_i32_1 = arith.constant 0 : i32
    return %c0_i32, %c0_i32_0 : i32, i32
  }
  func.func @transform_8(%arg0: i32) -> (i32, i32) {
    %c0_i32 = arith.constant 0 : i32
    %c0_i32_0 = arith.constant 0 : i32
    %c0_i32_1 = arith.constant 0 : i32
    return %c0_i32, %c0_i32_0 : i32, i32
  }
  func.func @transform_9(%arg0: i32) -> (i32, i32, i32) {
    %c0_i32 = arith.constant 0 : i32
    %c0_i32_0 = arith.constant 0 : i32
    %c0_i32_1 = arith.constant 0 : i32
    return %arg0, %c0_i32, %c0_i32_0 : i32, i32, i32
  }
}

</mosaic_0001>

<llo_original>
// kernel: discriminator_forward.2
$region0: #{discriminator_forward.2}
  #allocation0 [shape = 'u32[]', space=smem, size = 0x4, offset = 0x4, fixed_abs, tag = 'smem constant byte address 0x4 - core index']
  #allocation1 [shape = 'u32[144,128]{1,0:T(1,128)}', space=vmem, size = 0x12000, scoped, tag = 'internal scratch']
  %s0 = inlined_call_operand.vmem [shape: bf16[2,64,64], index: 0, kind: input, shape index: {}]
  %s1 = inlined_call_operand.vmem [shape: bf16[64,128], index: 1, kind: input, shape index: {}]
  %s2 = inlined_call_operand.vmem [shape: f32[1,128], index: 2, kind: input, shape index: {}]
  %s3 = inlined_call_operand.vmem [shape: f32[1,128], index: 3, kind: input, shape index: {}]
  %s4 = inlined_call_operand.vmem [shape: f32[1,128], index: 4, kind: input, shape index: {}]
  %s5 = inlined_call_operand.vmem [shape: f32[128,16], index: 5, kind: input, shape index: {}]
  %s6 = inlined_call_operand.vmem [shape: f32[16,128], index: 6, kind: input, shape index: {}]
  %s7 = inlined_call_operand.vmem [shape: bf16[2,64,128], index: 7, kind: output, shape index: {}]
  %s8 = sld [smem:[#allocation0]]
  $region61: #{discriminator_forward.2} parent=0
    _
  %s10 = ssub.s32 1, %s8
  %s11 = scalar_select 0, %s10, %s8
  loop: start=0, step=1, limit=4
  $region2: #{discriminator_forward.2} parent=0 // loop_pre_header
    _
  $region3: #{discriminator_forward.2} parent=0 // loop_header
    %s13 = sphi 0, %s17
    %p14 = scmp.ge.s32.totalorder %s13, 4
    %s23 = sphi 0, %s25
    %s26 = sphi 0, %s23
    %s27 = sphi 0, %s26
    %s43 = sphi 0, %s27
    %s47 = sphi 0, %s47
    %s49 = sphi 0, %s47
    %s50 = sphi 0, %s49
    %s64 = sphi 0, %s50
    %s68 = sphi 0, %s68
    %s70 = sphi 0, %s68
    %s71 = sphi 0, %s70
    %s85 = sphi 0, %s71
    %s89 = sphi 0, %s89
    %s91 = sphi 0, %s89
    %s92 = sphi 0, %s91
    %s106 = sphi 0, %s92
    %s110 = sphi 0, %s110
    %s112 = sphi 0, %s110
    %s113 = sphi 0, %s112
    %s127 = sphi 0, %s113
    %s131 = sphi 0, %s131
    %s133 = sphi 0, %s131
    %s134 = sphi 0, %s133
    %s148 = sphi 0, %s134
    %s152 = sphi 0, %s152
    %s154 = sphi 0, %s152
    %s155 = sphi 0, %s154
    %s169 = sphi 0, %s155
    %s175 = sphi 0, %s177
    %s178 = sphi 0, %s175
    %s179 = sphi 0, %s178
    %s195 = sphi 0, %s179
  $region4: #{discriminator_forward.2} parent=0 // loop_header_branch
    %16 = sbr.rel (%p14) target = $region8
  $region5: #{discriminator_forward.2} parent=0 // loop_body
    %s18 = ssub.s32 %s13, 1
    %s19 = ssub.s32 %s13, 2
    %s20 = sadd.s32 %s13, 1
    %s21 = ssub.s32 %s13, %s20
    %p22 = scmp.eq.s32.totalorder %s21, 0
    %s24 = sadd.s32 %s23, 1
    %s25 = scalar_select %p22, %s23, %s24
    %p28 = pneg %p22
    %p29 = scmp.eq.s32.totalorder %s13, 1
    %p30 = por %p28, %p29
    %p31 = scmp.ne.s32.totalorder %s23, %s26
    %p32 = scmp.eq.s32.totalorder %s13, 0
    %p33 = por %p31, %p32
    %p34 = scmp.ne.s32.totalorder %s23, %s26
    %p35 = scmp.eq.s32.totalorder %s18, 1
    %p36 = por %p34, %p35
    %p37 = scmp.ne.s32.totalorder %s26, %s27
    %p38 = scmp.eq.s32.totalorder %s18, 0
    %p39 = por %p37, %p38
    %p40 = scmp.ne.s32.totalorder %s26, %s27
    %p41 = scmp.eq.s32.totalorder %s19, 1
    %p42 = por %p40, %p41
    %p44 = scmp.ne.s32.totalorder %s27, %s43
    %p45 = scmp.eq.s32.totalorder %s19, 0
    %p46 = por %p44, %p45
    %s48 = sadd.s32 %s47, 1
    %p51 = scmp.eq.s32.totalorder %s13, 1
    %p52 = scmp.ne.s32.totalorder %s47, %s49
    %p53 = scmp.eq.s32.totalorder %s13, 0
    %p54 = por %p52, %p53
    %p55 = scmp.ne.s32.totalorder %s47, %s49
    %p56 = scmp.eq.s32.totalorder %s18, 1
    %p57 = por %p55, %p56
    %p58 = scmp.ne.s32.totalorder %s49, %s50
    %p59 = scmp.eq.s32.totalorder %s18, 0
    %p60 = por %p58, %p59
    %p61 = scmp.ne.s32.totalorder %s49, %s50
    %p62 = scmp.eq.s32.totalorder %s19, 1
    %p63 = por %p61, %p62
    %p65 = scmp.ne.s32.totalorder %s50, %s64
    %p66 = scmp.eq.s32.totalorder %s19, 0
    %p67 = por %p65, %p66
    %s69 = sadd.s32 %s68, 1
    %p72 = scmp.eq.s32.totalorder %s13, 1
    %p73 = scmp.ne.s32.totalorder %s68, %s70
    %p74 = scmp.eq.s32.totalorder %s13, 0
    %p75 = por %p73, %p74
    %p76 = scmp.ne.s32.totalorder %s68, %s70
    %p77 = scmp.eq.s32.totalorder %s18, 1
    %p78 = por %p76, %p77
    %p79 = scmp.ne.s32.totalorder %s70, %s71
    %p80 = scmp.eq.s32.totalorder %s18, 0
    %p81 = por %p79, %p80
    %p82 = scmp.ne.s32.totalorder %s70, %s71
    %p83 = scmp.eq.s32.totalorder %s19, 1
    %p84 = por %p82, %p83
    %p86 = scmp.ne.s32.totalorder %s71, %s85
    %p87 = scmp.eq.s32.totalorder %s19, 0
    %p88 = por %p86, %p87
    %s90 = sadd.s32 %s89, 1
    %p93 = scmp.eq.s32.totalorder %s13, 1
    %p94 = scmp.ne.s32.totalorder %s89, %s91
    %p95 = scmp.eq.s32.totalorder %s13, 0
    %p96 = por %p94, %p95
    %p97 = scmp.ne.s32.totalorder %s89, %s91
    %p98 = scmp.eq.s32.totalorder %s18, 1
    %p99 = por %p97, %p98
    %p100 = scmp.ne.s32.totalorder %s91, %s92
    %p101 = scmp.eq.s32.totalorder %s18, 0
    %p102 = por %p100, %p101
    %p103 = scmp.ne.s32.totalorder %s91, %s92
    %p104 = scmp.eq.s32.totalorder %s19, 1
    %p105 = por %p103, %p104
    %p107 = scmp.ne.s32.totalorder %s92, %s106
    %p108 = scmp.eq.s32.totalorder %s19, 0
    %p109 = por %p107, %p108
    %s111 = sadd.s32 %s110, 1
    %p114 = scmp.eq.s32.totalorder %s13, 1
    %p115 = scmp.ne.s32.totalorder %s110, %s112
    %p116 = scmp.eq.s32.totalorder %s13, 0
    %p117 = por %p115, %p116
    %p118 = scmp.ne.s32.totalorder %s110, %s112
    %p119 = scmp.eq.s32.totalorder %s18, 1
    %p120 = por %p118, %p119
    %p121 = scmp.ne.s32.totalorder %s112, %s113
    %p122 = scmp.eq.s32.totalorder %s18, 0
    %p123 = por %p121, %p122
    %p124 = scmp.ne.s32.totalorder %s112, %s113
    %p125 = scmp.eq.s32.totalorder %s19, 1
    %p126 = por %p124, %p125
    %p128 = scmp.ne.s32.totalorder %s113, %s127
    %p129 = scmp.eq.s32.totalorder %s19, 0
    %p130 = por %p128, %p129
    %s132 = sadd.s32 %s131, 1
    %p135 = scmp.eq.s32.totalorder %s13, 1
    %p136 = scmp.ne.s32.totalorder %s131, %s133
    %p137 = scmp.eq.s32.totalorder %s13, 0
    %p138 = por %p136, %p137
    %p139 = scmp.ne.s32.totalorder %s131, %s133
    %p140 = scmp.eq.s32.totalorder %s18, 1
    %p141 = por %p139, %p140
    %p142 = scmp.ne.s32.totalorder %s133, %s134
    %p143 = scmp.eq.s32.totalorder %s18, 0
    %p144 = por %p142, %p143
    %p145 = scmp.ne.s32.totalorder %s133, %s134
    %p146 = scmp.eq.s32.totalorder %s19, 1
    %p147 = por %p145, %p146
    %p149 = scmp.ne.s32.totalorder %s134, %s148
    %p150 = scmp.eq.s32.totalorder %s19, 0
    %p151 = por %p149, %p150
    %s153 = sadd.s32 %s152, 1
    %p156 = scmp.eq.s32.totalorder %s13, 1
    %p157 = scmp.ne.s32.totalorder %s152, %s154
    %p158 = scmp.eq.s32.totalorder %s13, 0
    %p159 = por %p157, %p158
    %p160 = scmp.ne.s32.totalorder %s152, %s154
    %p161 = scmp.eq.s32.totalorder %s18, 1
    %p162 = por %p160, %p161
    %p163 = scmp.ne.s32.totalorder %s154, %s155
    %p164 = scmp.eq.s32.totalorder %s18, 0
    %p165 = por %p163, %p164
    %p166 = scmp.ne.s32.totalorder %s154, %s155
    %p167 = scmp.eq.s32.totalorder %s19, 1
    %p168 = por %p166, %p167
    %p170 = scmp.ne.s32.totalorder %s155, %s169
    %p171 = scmp.eq.s32.totalorder %s19, 0
    %p172 = por %p170, %p171
    %s173 = ssub.s32 %s13, %s20
    %p174 = scmp.eq.s32.totalorder %s173, 0
    %s176 = sadd.s32 %s175, 1
    %s177 = scalar_select %p174, %s175, %s176
    %p180 = pneg %p174
    %p181 = scmp.eq.s32.totalorder %s13, 1
    %p182 = por %p180, %p181
    %p183 = scmp.ne.s32.totalorder %s175, %s178
    %p184 = scmp.eq.s32.totalorder %s13, 0
    %p185 = por %p183, %p184
    %p186 = scmp.ne.s32.totalorder %s175, %s178
    %p187 = scmp.eq.s32.totalorder %s18, 1
    %p188 = por %p186, %p187
    %p189 = scmp.ne.s32.totalorder %s178, %s179
    %p190 = scmp.eq.s32.totalorder %s18, 0
    %p191 = por %p189, %p190
    %p192 = scmp.ne.s32.totalorder %s178, %s179
    %p193 = scmp.eq.s32.totalorder %s19, 1
    %p194 = por %p192, %p193
    %p196 = scmp.ne.s32.totalorder %s179, %s195
    %p197 = scmp.eq.s32.totalorder %s19, 0
    %p198 = por %p196, %p197
    %p199 = scmp.le.s32.totalorder 1, %s13
    %p200 = scmp.lt.s32.totalorder %s13, 3
    %p201 = pnand %p199, %p200
    %p202 = pneg %p201
    // Predicated region
    $region9: #{discriminator_forward.2} parent=5 // pred_check
      _
    $region10: #{discriminator_forward.2} parent=5 // pred_check_branch
      %204 = sbr.rel (%p201) target = $region12
    $region11: #{discriminator_forward.2} parent=5 // pred_region
      %s205 = ssub.s32 %s13, 1
      // Predicated region
      $region13: #{discriminator_forward.2} parent=11 // pred_check
        %p206 = pneg %p60
      $region14: #{discriminator_forward.2} parent=11 // pred_check_branch
        %208 = sbr.rel (%p206) target = $region16
      $region15: #{discriminator_forward.2} parent=11 // pred_region
        _
      $region16: #{discriminator_forward.2} parent=11 // pred_fallthru
        _
      // Predicated region
      $region17: #{discriminator_forward.2} parent=11 // pred_check
        %p209 = pneg %p81
      $region18: #{discriminator_forward.2} parent=11 // pred_check_branch
        %211 = sbr.rel (%p209) target = $region20
      $region19: #{discriminator_forward.2} parent=11 // pred_region
        _
      $region20: #{discriminator_forward.2} parent=11 // pred_fallthru
        _
      // Predicated region
      $region21: #{discriminator_forward.2} parent=11 // pred_check
        %p212 = pneg %p102
      $region22: #{discriminator_forward.2} parent=11 // pred_check_branch
        %214 = sbr.rel (%p212) target = $region24
      $region23: #{discriminator_forward.2} parent=11 // pred_region
        _
      $region24: #{discriminator_forward.2} parent=11 // pred_fallthru
        _
      // Predicated region
      $region25: #{discriminator_forward.2} parent=11 // pred_check
        %p215 = pneg %p123
      $region26: #{discriminator_forward.2} parent=11 // pred_check_branch
        %217 = sbr.rel (%p215) target = $region28
      $region27: #{discriminator_forward.2} parent=11 // pred_region
        _
      $region28: #{discriminator_forward.2} parent=11 // pred_fallthru
        _
      // Predicated region
      $region29: #{discriminator_forward.2} parent=11 // pred_check
        %p218 = pneg %p144
      $region30: #{discriminator_forward.2} parent=11 // pred_check_branch
        %220 = sbr.rel (%p218) target = $region32
      $region31: #{discriminator_forward.2} parent=11 // pred_region
        _
      $region32: #{discriminator_forward.2} parent=11 // pred_fallthru
        _
      // Predicated region
      $region33: #{discriminator_forward.2} parent=11 // pred_check
        %p221 = pneg %p165
      $region34: #{discriminator_forward.2} parent=11 // pred_check_branch
        %223 = sbr.rel (%p221) target = $region36
      $region35: #{discriminator_forward.2} parent=11 // pred_region
        _
      $region36: #{discriminator_forward.2} parent=11 // pred_fallthru
        _
    $region12: #{discriminator_forward.2} parent=5 // pred_fallthru
      _
    %p224 = scmp.lt.s32.totalorder %s13, 2
    // Predicated region
    $region37: #{discriminator_forward.2} parent=5 // pred_check
      %p225 = pneg %p224
    $region38: #{discriminator_forward.2} parent=5 // pred_check_branch
      %227 = sbr.rel (%p225) target = $region40
    $region39: #{discriminator_forward.2} parent=5 // pred_region
      // Predicated region
      $region41: #{discriminator_forward.2} parent=39 // pred_check
        %p228 = pneg %p33
      $region42: #{discriminator_forward.2} parent=39 // pred_check_branch
        %230 = sbr.rel (%p228) target = $region44
      $region43: #{discriminator_forward.2} parent=39 // pred_region
        %p231 = scmp.lt.s32.totalorder %s13, 1
        %s232 = scalar_select %p231, %s13, 1
        %s233 = smul.addr %s232, 8
        %s234 = smul.addr %s233, 4
        %s235 = scalar_lea.vmem %s0, %s234
      $region44: #{discriminator_forward.2} parent=39 // pred_fallthru
        _
    $region40: #{discriminator_forward.2} parent=5 // pred_fallthru
      _
    %p236 = scmp.le.s32.totalorder 1, %s13
    %p237 = scmp.lt.s32.totalorder %s13, 3
    %p238 = pnand %p236, %p237
    %p239 = pneg %p238
    // Predicated region
    $region45: #{discriminator_forward.2} parent=5 // pred_check
      _
    $region46: #{discriminator_forward.2} parent=5 // pred_check_branch
      %241 = sbr.rel (%p238) target = $region48
    $region47: #{discriminator_forward.2} parent=5 // pred_region
      %s242 = ssub.s32 %s13, 1
      %p243 = scmp.lt.s32.totalorder %s18, 1
      %s244 = scalar_select %p243, %s18, 1
      %s245 = smul.addr %s244, 8
      %s246 = smul.addr %s245, 4
      %s247 = scalar_lea.vmem %s0, %s246
      %p248 = pneg %p39
      %p249 = pneg %p36
      %p250 = pneg %p60
      %p251 = pneg %p57
      %p252 = pneg %p81
      %p253 = pneg %p78
      %p254 = pneg %p102
      %p255 = pneg %p99
      %p256 = pneg %p123
      %p257 = pneg %p120
      %p258 = pneg %p144
      %p259 = pneg %p141
      %p260 = pneg %p165
      %p261 = pneg %p162
      %p262 = pneg %p191
      %p263 = pneg %p188
      %p264 = scmp.lt.s32.totalorder %s18, 1
      %s265 = scalar_select %p264, %s18, 1
      %s266 = smul.addr %s265, 8
      %s267 = smul.addr %s266, 4
      %s268 = scalar_lea.vmem %s7, %s267
      %p269 = scmp.lt.s32.totalorder %s18, 1
      %s270 = scalar_select %p269, %s18, 1
      %s271 = smul.addr %s270, 8
      %s272 = smul.addr %s271, 4
      %s273 = scalar_lea.vmem %s0, %s272
      %p274 = scmp.lt.s32.totalorder %s18, 1
      %s275 = scalar_select %p274, %s18, 1
      %s276 = smul.addr %s275, 8
      %s277 = smul.addr %s276, 4
      %s278 = scalar_lea.vmem %s7, %s277
      %v280 = vld [vmem:[%s273] sm:$0xf]
      %v281 = vld [vmem:[%s273 + $0x4] sm:$0xf]
      %v282 = vld [vmem:[%s273 + $0x8] sm:$0xf]
      %v283 = vld [vmem:[%s273 + $0xc] sm:$0xf]
      %v284 = vld [vmem:[%s273 + $0x10] sm:$0xf]
      %v285 = vld [vmem:[%s273 + $0x14] sm:$0xf]
      %v286 = vld [vmem:[%s273 + $0x18] sm:$0xf]
      %v287 = vld [vmem:[%s273 + $0x1c] sm:$0xf]
      %v288 = vld [vmem:[%s1] sm:$0xf]
      %v289 = vld [vmem:[%s1 + $0x4] sm:$0xf]
      %v290 = vld [vmem:[%s1 + $0x8] sm:$0xf]
      %v291 = vld [vmem:[%s1 + $0xc] sm:$0xf]
      %v292 = vld [vmem:[%s1 + $0x10] sm:$0xf]
      %v293 = vld [vmem:[%s1 + $0x14] sm:$0xf]
      %v294 = vld [vmem:[%s1 + $0x18] sm:$0xf]
      %v295 = vld [vmem:[%s1 + $0x1c] sm:$0xf]
      %v296 = vld [vmem:[%s2] sm:$0x1]
      %v298 = vlaneseq
      %v299 = vshrl.u32 %v298, 7
      %v300 = vsub.s32 0, %v299
      %v301 = vrot.slane %v296, %v300
      %v311 = vunpack.c.l.b16 %v280
      %v312 = vunpack.c.l.b16 %v281
      %v313 = vunpack.c.l.b16 %v282
      %v314 = vunpack.c.l.b16 %v283
      %v315 = vunpack.c.l.b16 %v284
      %v316 = vunpack.c.l.b16 %v285
      %v317 = vunpack.c.l.b16 %v286
      %v318 = vunpack.c.l.b16 %v287
      %v319 = vpack.c.b16 %v312, %v311
      %v320 = vpack.c.b16 %v314, %v313
      %v321 = vpack.c.b16 %v316, %v315
      %v322 = vpack.c.b16 %v318, %v317
      %v331 = vunpack.c.l.b16 %v288
      %v332 = vunpack.c.l.b16 %v289
      %v333 = vunpack.c.l.b16 %v290
      %v334 = vunpack.c.l.b16 %v291
      %v335 = vunpack.c.l.b16 %v292
      %v336 = vunpack.c.l.b16 %v293
      %v337 = vunpack.c.l.b16 %v294
      %v338 = vunpack.c.l.b16 %v295
      %v339 = vpack.c.b16 %v332, %v331
      %v340 = vpack.c.b16 %v334, %v333
      %v341 = vpack.c.b16 %v336, %v335
      %v342 = vpack.c.b16 %v338, %v337
      %vm347 = vcmask 523264
      %v349 = vsel %vm347, %v319, 0
      %v352 = vsel %vm347, %v320, 0
      %v355 = vsel %vm347, %v321, 0
      %v358 = vsel %vm347, %v322, 0
      %360 = vmatprep.subr.bf16.mxu0 0
      %361 = vmatpush1.bf16.msra.mxu0 %v339
      %362 = vmatprep.subr.bf16.mxu0 0
      %363 = vmatpush1.bf16.msra.mxu0 %v340
      %364 = vmatprep.subr.bf16.mxu0 0
      %365 = vmatpush1.bf16.msra.mxu0 %v341
      %366 = vmatprep.subr.bf16.mxu0 0
      %367 = vmatpush1.bf16.msra.mxu0 %v342
      %368 = vmatprep.subr.bf16.mxu0 0
      %369 = vmatpush1.bf16.msra.mxu0 0
      %370 = vmatprep.subr.bf16.mxu0 0
      %371 = vmatpush1.bf16.msra.mxu0 0
      %372 = vmatprep.subr.bf16.mxu0 0
      %373 = vmatpush1.bf16.msra.mxu0 0
      %374 = vmatprep.subr.bf16.mxu0 0
      %375 = vmatpush1.bf16.msra.mxu0 0
      %376 = vmatprep.subr.bf16.mxu0 0
      %377 = vmatpush1.bf16.msra.mxu0 0
      %378 = vmatprep.subr.bf16.mxu0 0
      %379 = vmatpush1.bf16.msra.mxu0 0
      %380 = vmatprep.subr.bf16.mxu0 0
      %381 = vmatpush1.bf16.msra.mxu0 0
      %382 = vmatprep.subr.bf16.mxu0 0
      %383 = vmatpush1.bf16.msra.mxu0 0
      %384 = vmatprep.subr.bf16.mxu0 0
      %385 = vmatpush1.bf16.msra.mxu0 0
      %386 = vmatprep.subr.bf16.mxu0 0
      %387 = vmatpush1.bf16.msra.mxu0 0
      %388 = vmatprep.subr.bf16.mxu0 0
      %389 = vmatpush1.bf16.msra.mxu0 0
      %390 = vmatprep.subr.bf16.mxu0 0
      %391 = vmatpush1.bf16.msra.mxu0 0
      %392 = vmatprep.mubr.bf16.mxu0 0
      %393 = vmatmul.mubr.bf16.gmra.mrb[0].mxu0 %v349
      %v394 = vpop.f32.mrb[0].mxu0
      %v395 = vadd.f32 %v301, %v394
      %v396 = vpop.f32.mrb[0].mxu0
      %v397 = vpop.f32.mrb[0].mxu0
      %v398 = vadd.f32 %v301, %v397
      %v399 = vpop.f32.mrb[0].mxu0
      %400 = vmatprep.mubr.bf16.mxu0 0
      %401 = vmatmul.mubr.bf16.gmra.mrb[0].mxu0 %v352
      %v402 = vpop.f32.mrb[0].mxu0
      %v403 = vadd.f32 %v301, %v402
      %v404 = vpop.f32.mrb[0].mxu0
      %v405 = vpop.f32.mrb[0].mxu0
      %v406 = vadd.f32 %v301, %v405
      %v407 = vpop.f32.mrb[0].mxu0
      %408 = vmatprep.mubr.bf16.mxu0 0
      %409 = vmatmul.mubr.bf16.gmra.mrb[0].mxu0 %v355
      %v410 = vpop.f32.mrb[0].mxu0
      %v411 = vadd.f32 %v301, %v410
      %v412 = vpop.f32.mrb[0].mxu0
      %v413 = vpop.f32.mrb[0].mxu0
      %v414 = vadd.f32 %v301, %v413
      %v415 = vpop.f32.mrb[0].mxu0
      %416 = vmatprep.mubr.bf16.mxu0 0
      %417 = vmatmul.mubr.bf16.gmra.mrb[0].mxu0 %v358
      %v418 = vpop.f32.mrb[0].mxu0
      %v419 = vadd.f32 %v301, %v418
      %v420 = vpop.f32.mrb[0].mxu0
      %v421 = vpop.f32.mrb[0].mxu0
      %v422 = vadd.f32 %v301, %v421
      %v423 = vpop.f32.mrb[0].mxu0
      %424 = vdwg.mxu0
      %v425 = vadd.f32 %v395, %v398
      %v426 = vadd.f32 %v425, %v403
      %v427 = vadd.f32 %v426, %v406
      %v428 = vadd.f32 %v427, %v411
      %v429 = vadd.f32 %v428, %v414
      %v430 = vadd.f32 %v429, %v419
      %v431 = vadd.f32 %v430, %v422
      %v432 = vrot.slane %v431, 4
      %v433 = vadd.f32 %v431, %v432
      %v434 = vrot.slane %v433, 2
      %v435 = vadd.f32 %v433, %v434
      %v436 = vrot.slane %v435, 1
      %v437 = vadd.f32 %v435, %v436
      %v438 = vmul.f32 %v395, %v395
      %v439 = vmul.f32 %v398, %v398
      %v440 = vmul.f32 %v403, %v403
      %v441 = vmul.f32 %v406, %v406
      %v442 = vmul.f32 %v411, %v411
      %v443 = vmul.f32 %v414, %v414
      %v444 = vmul.f32 %v419, %v419
      %v445 = vmul.f32 %v422, %v422
      %v446 = vadd.f32 %v438, %v439
      %v447 = vadd.f32 %v446, %v440
      %v448 = vadd.f32 %v447, %v441
      %v449 = vadd.f32 %v448, %v442
      %v450 = vadd.f32 %v449, %v443
      %v451 = vadd.f32 %v450, %v444
      %v452 = vadd.f32 %v451, %v445
      %v453 = vrot.slane %v452, 4
      %v454 = vadd.f32 %v452, %v453
      %v455 = vrot.slane %v454, 2
      %v456 = vadd.f32 %v454, %v455
      %v457 = vrot.slane %v456, 1
      %v458 = vadd.f32 %v456, %v457
      %v459 = vld [vmem:[%s5] sm:$0xff]
      %v460 = vld [vmem:[%s5 + $0x8] sm:$0xff]
      %v461 = vld [vmem:[%s5 + $0x10] sm:$0xff]
      %v462 = vld [vmem:[%s5 + $0x18] sm:$0xff]
      %v463 = vld [vmem:[%s5 + $0x20] sm:$0xff]
      %v464 = vld [vmem:[%s5 + $0x28] sm:$0xff]
      %v465 = vld [vmem:[%s5 + $0x30] sm:$0xff]
      %v466 = vld [vmem:[%s5 + $0x38] sm:$0xff]
      %v467 = vld [vmem:[%s5 + $0x40] sm:$0xff]
      %v468 = vld [vmem:[%s5 + $0x48] sm:$0xff]
      %v469 = vld [vmem:[%s5 + $0x50] sm:$0xff]
      %v470 = vld [vmem:[%s5 + $0x58] sm:$0xff]
      %v471 = vld [vmem:[%s5 + $0x60] sm:$0xff]
      %v472 = vld [vmem:[%s5 + $0x68] sm:$0xff]
      %v473 = vld [vmem:[%s5 + $0x70] sm:$0xff]
      %v474 = vld [vmem:[%s5 + $0x78] sm:$0xff]
      %475 = vmatprep.subr.mxu0 0.0
      %476 = vmatpush1.msra.mxu0 %v459
      %477 = vmatprep.subr.mxu0 0.0
      %478 = vmatpush1.msra.mxu0 %v460
      %479 = vmatprep.subr.mxu0 0.0
      %480 = vmatpush1.msra.mxu0 %v461
      %481 = vmatprep.subr.mxu0 0.0
      %482 = vmatpush1.msra.mxu0 %v462
      %483 = vmatprep.subr.mxu0 0.0
      %484 = vmatpush1.msra.mxu0 %v463
      %485 = vmatprep.subr.mxu0 0.0
      %486 = vmatpush1.msra.mxu0 %v464
      %487 = vmatprep.subr.mxu0 0.0
      %488 = vmatpush1.msra.mxu0 %v465
      %489 = vmatprep.subr.mxu0 0.0
      %490 = vmatpush1.msra.mxu0 %v466
      %491 = vmatprep.subr.mxu0 0.0
      %492 = vmatpush1.msra.mxu0 %v467
      %493 = vmatprep.subr.mxu0 0.0
      %494 = vmatpush1.msra.mxu0 %v468
      %495 = vmatprep.subr.mxu0 0.0
      %496 = vmatpush1.msra.mxu0 %v469
      %497 = vmatprep.subr.mxu0 0.0
      %498 = vmatpush1.msra.mxu0 %v470
      %499 = vmatprep.subr.mxu0 0.0
      %500 = vmatpush1.msra.mxu0 %v471
      %501 = vmatprep.subr.mxu0 0.0
      %502 = vmatpush1.msra.mxu0 %v472
      %503 = vmatprep.subr.mxu0 0.0
      %504 = vmatpush1.msra.mxu0 %v473
      %505 = vmatprep.subr.mxu0 0.0
      %506 = vmatpush1.msra.mxu0 %v474
      %507 = vmatprep.subr.mxu0 0.0
      %508 = vmatpush1.msra.mxu0 0.0
      %509 = vmatprep.subr.mxu0 0.0
      %510 = vmatpush1.msra.mxu0 0.0
      %511 = vmatprep.subr.mxu0 0.0
      %512 = vmatpush1.msra.mxu0 0.0
      %513 = vmatprep.subr.mxu0 0.0
      %514 = vmatpush1.msra.mxu0 0.0
      %515 = vmatprep.subr.mxu0 0.0
      %516 = vmatpush1.msra.mxu0 0.0
      %517 = vmatprep.subr.mxu0 0.0
      %518 = vmatpush1.msra.mxu0 0.0
      %519 = vmatprep.subr.mxu0 0.0
      %520 = vmatpush1.msra.mxu0 0.0
      %521 = vmatprep.subr.mxu0 0.0
      %522 = vmatpush1.msra.mxu0 0.0
      %523 = vmatprep.subr.mxu0 0.0
      %524 = vmatpush1.msra.mxu0 0.0
      %525 = vmatprep.subr.mxu0 0.0
      %526 = vmatpush1.msra.mxu0 0.0
      %527 = vmatprep.subr.mxu0 0.0
      %528 = vmatpush1.msra.mxu0 0.0
      %529 = vmatprep.subr.mxu0 0.0
      %530 = vmatpush1.msra.mxu0 0.0
      %531 = vmatprep.subr.mxu0 0.0
      %532 = vmatpush1.msra.mxu0 0.0
      %533 = vmatprep.subr.mxu0 0.0
      %534 = vmatpush1.msra.mxu0 0.0
      %535 = vmatprep.subr.mxu0 0.0
      %536 = vmatpush1.msra.mxu0 0.0
      %537 = vmatprep.subr.mxu0 0.0
      %538 = vmatpush1.msra.mxu0 0.0
      %539 = vmatprep.mubr.f32.mxu0 0.0
      %540 = vmatmul.mubr.f32.gmra.mrb[0].mxu0 %v437
      %v541 = vpop.f32.mrb[0].mxu0
      %v542 = vadd.f32 0.0, %v541
      %v543 = vpop.f32.mrb[0].mxu0
      %544 = vdwg.mxu0
      %545 = vmatprep.subr.mxu0 0.0
      %546 = vmatpush1.msra.mxu0 %v459
      %547 = vmatprep.subr.mxu0 0.0
      %548 = vmatpush1.msra.mxu0 %v460
      %549 = vmatprep.subr.mxu0 0.0
      %550 = vmatpush1.msra.mxu0 %v461
      %551 = vmatprep.subr.mxu0 0.0
      %552 = vmatpush1.msra.mxu0 %v462
      %553 = vmatprep.subr.mxu0 0.0
      %554 = vmatpush1.msra.mxu0 %v463
      %555 = vmatprep.subr.mxu0 0.0
      %556 = vmatpush1.msra.mxu0 %v464
      %557 = vmatprep.subr.mxu0 0.0
      %558 = vmatpush1.msra.mxu0 %v465
      %559 = vmatprep.subr.mxu0 0.0
      %560 = vmatpush1.msra.mxu0 %v466
      %561 = vmatprep.subr.mxu0 0.0
      %562 = vmatpush1.msra.mxu0 %v467
      %563 = vmatprep.subr.mxu0 0.0
      %564 = vmatpush1.msra.mxu0 %v468
      %565 = vmatprep.subr.mxu0 0.0
      %566 = vmatpush1.msra.mxu0 %v469
      %567 = vmatprep.subr.mxu0 0.0
      %568 = vmatpush1.msra.mxu0 %v470
      %569 = vmatprep.subr.mxu0 0.0
      %570 = vmatpush1.msra.mxu0 %v471
      %571 = vmatprep.subr.mxu0 0.0
      %572 = vmatpush1.msra.mxu0 %v472
      %573 = vmatprep.subr.mxu0 0.0
      %574 = vmatpush1.msra.mxu0 %v473
      %575 = vmatprep.subr.mxu0 0.0
      %576 = vmatpush1.msra.mxu0 %v474
      %577 = vmatprep.subr.mxu0 0.0
      %578 = vmatpush1.msra.mxu0 0.0
      %579 = vmatprep.subr.mxu0 0.0
      %580 = vmatpush1.msra.mxu0 0.0
      %581 = vmatprep.subr.mxu0 0.0
      %582 = vmatpush1.msra.mxu0 0.0
      %583 = vmatprep.subr.mxu0 0.0
      %584 = vmatpush1.msra.mxu0 0.0
      %585 = vmatprep.subr.mxu0 0.0
      %586 = vmatpush1.msra.mxu0 0.0
      %587 = vmatprep.subr.mxu0 0.0
      %588 = vmatpush1.msra.mxu0 0.0
      %589 = vmatprep.subr.mxu0 0.0
      %590 = vmatpush1.msra.mxu0 0.0
      %591 = vmatprep.subr.mxu0 0.0
      %592 = vmatpush1.msra.mxu0 0.0
      %593 = vmatprep.subr.mxu0 0.0
      %594 = vmatpush1.msra.mxu0 0.0
      %595 = vmatprep.subr.mxu0 0.0
      %596 = vmatpush1.msra.mxu0 0.0
      %597 = vmatprep.subr.mxu0 0.0
      %598 = vmatpush1.msra.mxu0 0.0
      %599 = vmatprep.subr.mxu0 0.0
      %600 = vmatpush1.msra.mxu0 0.0
      %601 = vmatprep.subr.mxu0 0.0
      %602 = vmatpush1.msra.mxu0 0.0
      %603 = vmatprep.subr.mxu0 0.0
      %604 = vmatpush1.msra.mxu0 0.0
      %605 = vmatprep.subr.mxu0 0.0
      %606 = vmatpush1.msra.mxu0 0.0
      %607 = vmatprep.subr.mxu0 0.0
      %608 = vmatpush1.msra.mxu0 0.0
      %609 = vmatprep.mubr.f32.mxu0 0.0
      %610 = vmatmul.mubr.f32.gmra.mrb[0].mxu0 %v458
      %v611 = vpop.f32.mrb[0].mxu0
      %v612 = vadd.f32 0.0, %v611
      %v613 = vpop.f32.mrb[0].mxu0
      %614 = vdwg.mxu0
      %v615 = vrcp.pop 128.0
      %v616 = vmul.f32 %v542, %v615
      %v617 = vmul.f32 %v612, %v615
      %v618 = vmul.f32 %v616, %v616
      %v619 = vsub.f32 %v617, %v618
      %v620 = vadd.f32 %v619, 1e-05
      %v621 = vrsqrt.pop %v620
      %v622 = vld [vmem:[%s6] sm:$0xff]
      %v623 = vld [vmem:[%s6 + $0x8] sm:$0xff]
      %vm624 = vcmask 130048
      %v626 = vsel %vm624, %v616, 0
      %628 = vmatprep.subr.mxu0 0.0
      %629 = vmatpush1.msra.mxu0 %v622
      %630 = vmatprep.subr.mxu0 0.0
      %631 = vmatpush1.msra.mxu0 %v623
      %632 = vmatprep.subr.mxu0 0.0
      %633 = vmatpush1.msra.mxu0 0.0
      %634 = vmatprep.subr.mxu0 0.0
      %635 = vmatpush1.msra.mxu0 0.0
      %636 = vmatprep.subr.mxu0 0.0
      %637 = vmatpush1.msra.mxu0 0.0
      %638 = vmatprep.subr.mxu0 0.0
      %639 = vmatpush1.msra.mxu0 0.0
      %640 = vmatprep.subr.mxu0 0.0
      %641 = vmatpush1.msra.mxu0 0.0
      %642 = vmatprep.subr.mxu0 0.0
      %643 = vmatpush1.msra.mxu0 0.0
      %644 = vmatprep.subr.mxu0 0.0
      %645 = vmatpush1.msra.mxu0 0.0
      %646 = vmatprep.subr.mxu0 0.0
      %647 = vmatpush1.msra.mxu0 0.0
      %648 = vmatprep.subr.mxu0 0.0
      %649 = vmatpush1.msra.mxu0 0.0
      %650 = vmatprep.subr.mxu0 0.0
      %651 = vmatpush1.msra.mxu0 0.0
      %652 = vmatprep.subr.mxu0 0.0
      %653 = vmatpush1.msra.mxu0 0.0
      %654 = vmatprep.subr.mxu0 0.0
      %655 = vmatpush1.msra.mxu0 0.0
      %656 = vmatprep.subr.mxu0 0.0
      %657 = vmatpush1.msra.mxu0 0.0
      %658 = vmatprep.subr.mxu0 0.0
      %659 = vmatpush1.msra.mxu0 0.0
      %660 = vmatprep.subr.mxu0 0.0
      %661 = vmatpush1.msra.mxu0 0.0
      %662 = vmatprep.subr.mxu0 0.0
      %663 = vmatpush1.msra.mxu0 0.0
      %664 = vmatprep.subr.mxu0 0.0
      %665 = vmatpush1.msra.mxu0 0.0
      %666 = vmatprep.subr.mxu0 0.0
      %667 = vmatpush1.msra.mxu0 0.0
      %668 = vmatprep.subr.mxu0 0.0
      %669 = vmatpush1.msra.mxu0 0.0
      %670 = vmatprep.subr.mxu0 0.0
      %671 = vmatpush1.msra.mxu0 0.0
      %672 = vmatprep.subr.mxu0 0.0
      %673 = vmatpush1.msra.mxu0 0.0
      %674 = vmatprep.subr.mxu0 0.0
      %675 = vmatpush1.msra.mxu0 0.0
      %676 = vmatprep.subr.mxu0 0.0
      %677 = vmatpush1.msra.mxu0 0.0
      %678 = vmatprep.subr.mxu0 0.0
      %679 = vmatpush1.msra.mxu0 0.0
      %680 = vmatprep.subr.mxu0 0.0
      %681 = vmatpush1.msra.mxu0 0.0
      %682 = vmatprep.subr.mxu0 0.0
      %683 = vmatpush1.msra.mxu0 0.0
      %684 = vmatprep.subr.mxu0 0.0
      %685 = vmatpush1.msra.mxu0 0.0
      %686 = vmatprep.subr.mxu0 0.0
      %687 = vmatpush1.msra.mxu0 0.0
      %688 = vmatprep.subr.mxu0 0.0
      %689 = vmatpush1.msra.mxu0 0.0
      %690 = vmatprep.subr.mxu0 0.0
      %691 = vmatpush1.msra.mxu0 0.0
      %692 = vmatprep.mubr.f32.mxu0 0.0
      %693 = vmatmul.mubr.f32.gmra.mrb[0].mxu0 %v626
      %v694 = vpop.f32.mrb[0].mxu0
      %v695 = vadd.f32 0.0, %v694
      %v696 = vpop.f32.mrb[0].mxu0
      %697 = vdwg.mxu0
      %v699 = vsel %vm624, %v621, 0
      %701 = vmatprep.subr.mxu0 0.0
      %702 = vmatpush1.msra.mxu0 %v622
      %703 = vmatprep.subr.mxu0 0.0
      %704 = vmatpush1.msra.mxu0 %v623
      %705 = vmatprep.subr.mxu0 0.0
      %706 = vmatpush1.msra.mxu0 0.0
      %707 = vmatprep.subr.mxu0 0.0
      %708 = vmatpush1.msra.mxu0 0.0
      %709 = vmatprep.subr.mxu0 0.0
      %710 = vmatpush1.msra.mxu0 0.0
      %711 = vmatprep.subr.mxu0 0.0
      %712 = vmatpush1.msra.mxu0 0.0
      %713 = vmatprep.subr.mxu0 0.0
      %714 = vmatpush1.msra.mxu0 0.0
      %715 = vmatprep.subr.mxu0 0.0
      %716 = vmatpush1.msra.mxu0 0.0
      %717 = vmatprep.subr.mxu0 0.0
      %718 = vmatpush1.msra.mxu0 0.0
      %719 = vmatprep.subr.mxu0 0.0
      %720 = vmatpush1.msra.mxu0 0.0
      %721 = vmatprep.subr.mxu0 0.0
      %722 = vmatpush1.msra.mxu0 0.0
      %723 = vmatprep.subr.mxu0 0.0
      %724 = vmatpush1.msra.mxu0 0.0
      %725 = vmatprep.subr.mxu0 0.0
      %726 = vmatpush1.msra.mxu0 0.0
      %727 = vmatprep.subr.mxu0 0.0
      %728 = vmatpush1.msra.mxu0 0.0
      %729 = vmatprep.subr.mxu0 0.0
      %730 = vmatpush1.msra.mxu0 0.0
      %731 = vmatprep.subr.mxu0 0.0
      %732 = vmatpush1.msra.mxu0 0.0
      %733 = vmatprep.subr.mxu0 0.0
      %734 = vmatpush1.msra.mxu0 0.0
      %735 = vmatprep.subr.mxu0 0.0
      %736 = vmatpush1.msra.mxu0 0.0
      %737 = vmatprep.subr.mxu0 0.0
      %738 = vmatpush1.msra.mxu0 0.0
      %739 = vmatprep.subr.mxu0 0.0
      %740 = vmatpush1.msra.mxu0 0.0
      %741 = vmatprep.subr.mxu0 0.0
      %742 = vmatpush1.msra.mxu0 0.0
      %743 = vmatprep.subr.mxu0 0.0
      %744 = vmatpush1.msra.mxu0 0.0
      %745 = vmatprep.subr.mxu0 0.0
      %746 = vmatpush1.msra.mxu0 0.0
      %747 = vmatprep.subr.mxu0 0.0
      %748 = vmatpush1.msra.mxu0 0.0
      %749 = vmatprep.subr.mxu0 0.0
      %750 = vmatpush1.msra.mxu0 0.0
      %751 = vmatprep.subr.mxu0 0.0
      %752 = vmatpush1.msra.mxu0 0.0
      %753 = vmatprep.subr.mxu0 0.0
      %754 = vmatpush1.msra.mxu0 0.0
      %755 = vmatprep.subr.mxu0 0.0
      %756 = vmatpush1.msra.mxu0 0.0
      %757 = vmatprep.subr.mxu0 0.0
      %758 = vmatpush1.msra.mxu0 0.0
      %759 = vmatprep.subr.mxu0 0.0
      %760 = vmatpush1.msra.mxu0 0.0
      %761 = vmatprep.subr.mxu0 0.0
      %762 = vmatpush1.msra.mxu0 0.0
      %763 = vmatprep.subr.mxu0 0.0
      %764 = vmatpush1.msra.mxu0 0.0
      %765 = vmatprep.mubr.f32.mxu0 0.0
      %766 = vmatmul.mubr.f32.gmra.mrb[0].mxu0 %v699
      %v767 = vpop.f32.mrb[0].mxu0
      %v768 = vadd.f32 0.0, %v767
      %v769 = vpop.f32.mrb[0].mxu0
      %770 = vdwg.mxu0
      %v771 = vld [vmem:[%s3] sm:$0x1]
      %v772 = vmul.f32 %v768, %v771
      %v773 = vld [vmem:[%s4] sm:$0x1]
      %v774 = vmul.f32 %v695, %v772
      %v775 = vsub.f32 %v773, %v774
      %v776 = vlaneseq
      %v777 = vshrl.u32 %v776, 7
      %v778 = vsub.s32 0, %v777
      %v779 = vrot.slane %v772, %v778
      %v780 = vmul.f32 %v395, %v779
      %v781 = vmul.f32 %v398, %v779
      %v782 = vmul.f32 %v403, %v779
      %v783 = vmul.f32 %v406, %v779
      %v784 = vmul.f32 %v411, %v779
      %v785 = vmul.f32 %v414, %v779
      %v786 = vmul.f32 %v419, %v779
      %v787 = vmul.f32 %v422, %v779
      %v789 = vlaneseq
      %v790 = vshrl.u32 %v789, 7
      %v791 = vsub.s32 0, %v790
      %v792 = vrot.slane %v775, %v791
      %v794 = vadd.f32 %v780, %v792
      %v795 = vadd.f32 %v781, %v792
      %v796 = vadd.f32 %v782, %v792
      %v797 = vadd.f32 %v783, %v792
      %v798 = vadd.f32 %v784, %v792
      %v799 = vadd.f32 %v785, %v792
      %v800 = vadd.f32 %v786, %v792
      %v801 = vadd.f32 %v787, %v792
      %vm802 = vcmp.ge.f32.partialorder %v794, 0.0
      %vm803 = vcmp.ge.f32.partialorder %v795, 0.0
      %vm804 = vcmp.ge.f32.partialorder %v796, 0.0
      %vm805 = vcmp.ge.f32.partialorder %v797, 0.0
      %vm806 = vcmp.ge.f32.partialorder %v798, 0.0
      %vm807 = vcmp.ge.f32.partialorder %v799, 0.0
      %vm808 = vcmp.ge.f32.partialorder %v800, 0.0
      %vm809 = vcmp.ge.f32.partialorder %v801, 0.0
      %v810 = vmul.f32 %v794, 0.2
      %v811 = vmul.f32 %v795, 0.2
      %v812 = vmul.f32 %v796, 0.2
      %v813 = vmul.f32 %v797, 0.2
      %v814 = vmul.f32 %v798, 0.2
      %v815 = vmul.f32 %v799, 0.2
      %v816 = vmul.f32 %v800, 0.2
      %v817 = vmul.f32 %v801, 0.2
      %v818 = vsel %vm802, %v794, %v810
      %v819 = vsel %vm803, %v795, %v811
      %v820 = vsel %vm804, %v796, %v812
      %v821 = vsel %vm805, %v797, %v813
      %v822 = vsel %vm806, %v798, %v814
      %v823 = vsel %vm807, %v799, %v815
      %v824 = vsel %vm808, %v800, %v816
      %v825 = vsel %vm809, %v801, %v817
      %v826 = vpack.c.bf16 %v819, %v818
      %v827 = vpack.c.bf16 %v821, %v820
      %v828 = vpack.c.bf16 %v823, %v822
      %v829 = vpack.c.bf16 %v825, %v824
      %v834 = vunpack.c.l.b16 %v826
      %v835 = vunpack.c.h.b16 %v826
      %v836 = vunpack.c.l.b16 %v827
      %v837 = vunpack.c.h.b16 %v827
      %v838 = vunpack.c.l.b16 %v828
      %v839 = vunpack.c.h.b16 %v828
      %v840 = vunpack.c.l.b16 %v829
      %v841 = vunpack.c.h.b16 %v829
      %v842 = vpack.c.b16 %v834, %v834
      %v843 = vpack.c.b16 %v835, %v835
      %v844 = vpack.c.b16 %v836, %v836
      %v845 = vpack.c.b16 %v837, %v837
      %v846 = vpack.c.b16 %v838, %v838
      %v847 = vpack.c.b16 %v839, %v839
      %v848 = vpack.c.b16 %v840, %v840
      %v849 = vpack.c.b16 %v841, %v841
      %858 = vst [vmem:[%s278] sm:$0xf] %v842
      %859 = vst [vmem:[%s278 + $0x4] sm:$0xf] %v843
      %860 = vst [vmem:[%s278 + $0x8] sm:$0xf] %v844
      %861 = vst [vmem:[%s278 + $0xc] sm:$0xf] %v845
      %862 = vst [vmem:[%s278 + $0x10] sm:$0xf] %v846
      %863 = vst [vmem:[%s278 + $0x14] sm:$0xf] %v847
      %864 = vst [vmem:[%s278 + $0x18] sm:$0xf] %v848
      %865 = vst [vmem:[%s278 + $0x1c] sm:$0xf] %v849
      %p866 = scmp.lt.s32.totalorder %s18, 1
      %s867 = scalar_select %p866, %s18, 1
      %s868 = smul.addr %s867, 8
      %s869 = smul.addr %s868, 4
      %s870 = scalar_lea.vmem %s7, %s869
      // Predicated region
      $region49: #{discriminator_forward.2} parent=47 // pred_check
        %p871 = pneg %p188
      $region50: #{discriminator_forward.2} parent=47 // pred_check_branch
        %873 = sbr.rel (%p871) target = $region52
      $region51: #{discriminator_forward.2} parent=47 // pred_region
        _
      $region52: #{discriminator_forward.2} parent=47 // pred_fallthru
        _
    $region48: #{discriminator_forward.2} parent=5 // pred_fallthru
      _
    %p874 = scmp.le.s32.totalorder 2, %s13
    // Predicated region
    $region53: #{discriminator_forward.2} parent=5 // pred_check
      %p875 = pneg %p874
    $region54: #{discriminator_forward.2} parent=5 // pred_check_branch
      %877 = sbr.rel (%p875) target = $region56
    $region55: #{discriminator_forward.2} parent=5 // pred_region
      %s878 = ssub.s32 %s13, 2
      // Predicated region
      $region57: #{discriminator_forward.2} parent=55 // pred_check
        %p879 = pneg %p194
      $region58: #{discriminator_forward.2} parent=55 // pred_check_branch
        %881 = sbr.rel (%p879) target = $region60
      $region59: #{discriminator_forward.2} parent=55 // pred_region
        %p882 = scmp.lt.s32.totalorder %s19, 1
        %s883 = scalar_select %p882, %s19, 1
        %s884 = smul.addr %s883, 8
        %s885 = smul.addr %s884, 4
        %s886 = scalar_lea.vmem %s7, %s885
      $region60: #{discriminator_forward.2} parent=55 // pred_fallthru
        _
    $region56: #{discriminator_forward.2} parent=5 // pred_fallthru
      _
  $region6: #{discriminator_forward.2} parent=0 // loop_footer
    %s17 = sadd.s32 1, %s13
  $region7: #{discriminator_forward.2} parent=0 // loop_footer_branch
    %12 = sbr.rel target = $region3
  $region8: #{discriminator_forward.2} parent=0 // loop_exit
    _

// kernel: discriminator_forward.3
$region0: #{discriminator_forward.3}
  #allocation0 [shape = 'u32[]', space=smem, size = 0x4, offset = 0x4, fixed_abs, tag = 'smem constant byte address 0x4 - core index']
  #allocation1 [shape = 'u32[144,128]{1,0:T(1,128)}', space=vmem, size = 0x12000, scoped, tag = 'internal scratch']
  %s0 = inlined_call_operand.vmem [shape: bf16[2,16,512], index: 0, kind: input, shape index: {}]
  %s1 = inlined_call_operand.vmem [shape: bf16[512,128], index: 1, kind: input, shape index: {}]
  %s2 = inlined_call_operand.vmem [shape: f32[1,128], index: 2, kind: input, shape index: {}]
  %s3 = inlined_call_operand.vmem [shape: f32[1,128], index: 3, kind: input, shape index: {}]
  %s4 = inlined_call_operand.vmem [shape: f32[1,128], index: 4, kind: input, shape index: {}]
  %s5 = inlined_call_operand.vmem [shape: f32[128,16], index: 5, kind: input, shape index: {}]
  %s6 = inlined_call_operand.vmem [shape: f32[16,128], index: 6, kind: input, shape index: {}]
  %s7 = inlined_call_operand.vmem [shape: f32[16,128], index: 7, kind: input, shape index: {}]
  %s8 = inlined_call_operand.vmem [shape: f32[1,128], index: 8, kind: input, shape index: {}]
  %s9 = inlined_call_operand.vmem [shape: f32[2,1,128], index: 9, kind: output, shape index: {}]
  %s10 = sld [smem:[#allocation0]]
  $region69: #{discriminator_forward.3} parent=0
    _
  %s12 = ssub.s32 1, %s10
  %s13 = scalar_select 0, %s12, %s10
  loop: start=0, step=1, limit=4
  $region2: #{discriminator_forward.3} parent=0 // loop_pre_header
    _
  $region3: #{discriminator_forward.3} parent=0 // loop_header
    %s15 = sphi 0, %s19
    %p16 = scmp.ge.s32.totalorder %s15, 4
    %s25 = sphi 0, %s27
    %s28 = sphi 0, %s25
    %s29 = sphi 0, %s28
    %s45 = sphi 0, %s29
    %s49 = sphi 0, %s49
    %s51 = sphi 0, %s49
    %s52 = sphi 0, %s51
    %s66 = sphi 0, %s52
    %s70 = sphi 0, %s70
    %s72 = sphi 0, %s70
    %s73 = sphi 0, %s72
    %s87 = sphi 0, %s73
    %s91 = sphi 0, %s91
    %s93 = sphi 0, %s91
    %s94 = sphi 0, %s93
    %s108 = sphi 0, %s94
    %s112 = sphi 0, %s112
    %s114 = sphi 0, %s112
    %s115 = sphi 0, %s114
    %s129 = sphi 0, %s115
    %s133 = sphi 0, %s133
    %s135 = sphi 0, %s133
    %s136 = sphi 0, %s135
    %s150 = sphi 0, %s136
    %s154 = sphi 0, %s154
    %s156 = sphi 0, %s154
    %s157 = sphi 0, %s156
    %s171 = sphi 0, %s157
    %s175 = sphi 0, %s175
    %s177 = sphi 0, %s175
    %s178 = sphi 0, %s177
    %s192 = sphi 0, %s178
    %s196 = sphi 0, %s196
    %s198 = sphi 0, %s196
    %s199 = sphi 0, %s198
    %s213 = sphi 0, %s199
    %s219 = sphi 0, %s221
    %s222 = sphi 0, %s219
    %s223 = sphi 0, %s222
    %s239 = sphi 0, %s223
  $region4: #{discriminator_forward.3} parent=0 // loop_header_branch
    %18 = sbr.rel (%p16) target = $region8
  $region5: #{discriminator_forward.3} parent=0 // loop_body
    %s20 = ssub.s32 %s15, 1
    %s21 = ssub.s32 %s15, 2
    %s22 = sadd.s32 %s15, 1
    %s23 = ssub.s32 %s15, %s22
    %p24 = scmp.eq.s32.totalorder %s23, 0
    %s26 = sadd.s32 %s25, 1
    %s27 = scalar_select %p24, %s25, %s26
    %p30 = pneg %p24
    %p31 = scmp.eq.s32.totalorder %s15, 1
    %p32 = por %p30, %p31
    %p33 = scmp.ne.s32.totalorder %s25, %s28
    %p34 = scmp.eq.s32.totalorder %s15, 0
    %p35 = por %p33, %p34
    %p36 = scmp.ne.s32.totalorder %s25, %s28
    %p37 = scmp.eq.s32.totalorder %s20, 1
    %p38 = por %p36, %p37
    %p39 = scmp.ne.s32.totalorder %s28, %s29
    %p40 = scmp.eq.s32.totalorder %s20, 0
    %p41 = por %p39, %p40
    %p42 = scmp.ne.s32.totalorder %s28, %s29
    %p43 = scmp.eq.s32.totalorder %s21, 1
    %p44 = por %p42, %p43
    %p46 = scmp.ne.s32.totalorder %s29, %s45
    %p47 = scmp.eq.s32.totalorder %s21, 0
    %p48 = por %p46, %p47
    %s50 = sadd.s32 %s49, 1
    %p53 = scmp.eq.s32.totalorder %s15, 1
    %p54 = scmp.ne.s32.totalorder %s49, %s51
    %p55 = scmp.eq.s32.totalorder %s15, 0
    %p56 = por %p54, %p55
    %p57 = scmp.ne.s32.totalorder %s49, %s51
    %p58 = scmp.eq.s32.totalorder %s20, 1
    %p59 = por %p57, %p58
    %p60 = scmp.ne.s32.totalorder %s51, %s52
    %p61 = scmp.eq.s32.totalorder %s20, 0
    %p62 = por %p60, %p61
    %p63 = scmp.ne.s32.totalorder %s51, %s52
    %p64 = scmp.eq.s32.totalorder %s21, 1
    %p65 = por %p63, %p64
    %p67 = scmp.ne.s32.totalorder %s52, %s66
    %p68 = scmp.eq.s32.totalorder %s21, 0
    %p69 = por %p67, %p68
    %s71 = sadd.s32 %s70, 1
    %p74 = scmp.eq.s32.totalorder %s15, 1
    %p75 = scmp.ne.s32.totalorder %s70, %s72
    %p76 = scmp.eq.s32.totalorder %s15, 0
    %p77 = por %p75, %p76
    %p78 = scmp.ne.s32.totalorder %s70, %s72
    %p79 = scmp.eq.s32.totalorder %s20, 1
    %p80 = por %p78, %p79
    %p81 = scmp.ne.s32.totalorder %s72, %s73
    %p82 = scmp.eq.s32.totalorder %s20, 0
    %p83 = por %p81, %p82
    %p84 = scmp.ne.s32.totalorder %s72, %s73
    %p85 = scmp.eq.s32.totalorder %s21, 1
    %p86 = por %p84, %p85
    %p88 = scmp.ne.s32.totalorder %s73, %s87
    %p89 = scmp.eq.s32.totalorder %s21, 0
    %p90 = por %p88, %p89
    %s92 = sadd.s32 %s91, 1
    %p95 = scmp.eq.s32.totalorder %s15, 1
    %p96 = scmp.ne.s32.totalorder %s91, %s93
    %p97 = scmp.eq.s32.totalorder %s15, 0
    %p98 = por %p96, %p97
    %p99 = scmp.ne.s32.totalorder %s91, %s93
    %p100 = scmp.eq.s32.totalorder %s20, 1
    %p101 = por %p99, %p100
    %p102 = scmp.ne.s32.totalorder %s93, %s94
    %p103 = scmp.eq.s32.totalorder %s20, 0
    %p104 = por %p102, %p103
    %p105 = scmp.ne.s32.totalorder %s93, %s94
    %p106 = scmp.eq.s32.totalorder %s21, 1
    %p107 = por %p105, %p106
    %p109 = scmp.ne.s32.totalorder %s94, %s108
    %p110 = scmp.eq.s32.totalorder %s21, 0
    %p111 = por %p109, %p110
    %s113 = sadd.s32 %s112, 1
    %p116 = scmp.eq.s32.totalorder %s15, 1
    %p117 = scmp.ne.s32.totalorder %s112, %s114
    %p118 = scmp.eq.s32.totalorder %s15, 0
    %p119 = por %p117, %p118
    %p120 = scmp.ne.s32.totalorder %s112, %s114
    %p121 = scmp.eq.s32.totalorder %s20, 1
    %p122 = por %p120, %p121
    %p123 = scmp.ne.s32.totalorder %s114, %s115
    %p124 = scmp.eq.s32.totalorder %s20, 0
    %p125 = por %p123, %p124
    %p126 = scmp.ne.s32.totalorder %s114, %s115
    %p127 = scmp.eq.s32.totalorder %s21, 1
    %p128 = por %p126, %p127
    %p130 = scmp.ne.s32.totalorder %s115, %s129
    %p131 = scmp.eq.s32.totalorder %s21, 0
    %p132 = por %p130, %p131
    %s134 = sadd.s32 %s133, 1
    %p137 = scmp.eq.s32.totalorder %s15, 1
    %p138 = scmp.ne.s32.totalorder %s133, %s135
    %p139 = scmp.eq.s32.totalorder %s15, 0
    %p140 = por %p138, %p139
    %p141 = scmp.ne.s32.totalorder %s133, %s135
    %p142 = scmp.eq.s32.totalorder %s20, 1
    %p143 = por %p141, %p142
    %p144 = scmp.ne.s32.totalorder %s135, %s136
    %p145 = scmp.eq.s32.totalorder %s20, 0
    %p146 = por %p144, %p145
    %p147 = scmp.ne.s32.totalorder %s135, %s136
    %p148 = scmp.eq.s32.totalorder %s21, 1
    %p149 = por %p147, %p148
    %p151 = scmp.ne.s32.totalorder %s136, %s150
    %p152 = scmp.eq.s32.totalorder %s21, 0
    %p153 = por %p151, %p152
    %s155 = sadd.s32 %s154, 1
    %p158 = scmp.eq.s32.totalorder %s15, 1
    %p159 = scmp.ne.s32.totalorder %s154, %s156
    %p160 = scmp.eq.s32.totalorder %s15, 0
    %p161 = por %p159, %p160
    %p162 = scmp.ne.s32.totalorder %s154, %s156
    %p163 = scmp.eq.s32.totalorder %s20, 1
    %p164 = por %p162, %p163
    %p165 = scmp.ne.s32.totalorder %s156, %s157
    %p166 = scmp.eq.s32.totalorder %s20, 0
    %p167 = por %p165, %p166
    %p168 = scmp.ne.s32.totalorder %s156, %s157
    %p169 = scmp.eq.s32.totalorder %s21, 1
    %p170 = por %p168, %p169
    %p172 = scmp.ne.s32.totalorder %s157, %s171
    %p173 = scmp.eq.s32.totalorder %s21, 0
    %p174 = por %p172, %p173
    %s176 = sadd.s32 %s175, 1
    %p179 = scmp.eq.s32.totalorder %s15, 1
    %p180 = scmp.ne.s32.totalorder %s175, %s177
    %p181 = scmp.eq.s32.totalorder %s15, 0
    %p182 = por %p180, %p181
    %p183 = scmp.ne.s32.totalorder %s175, %s177
    %p184 = scmp.eq.s32.totalorder %s20, 1
    %p185 = por %p183, %p184
    %p186 = scmp.ne.s32.totalorder %s177, %s178
    %p187 = scmp.eq.s32.totalorder %s20, 0
    %p188 = por %p186, %p187
    %p189 = scmp.ne.s32.totalorder %s177, %s178
    %p190 = scmp.eq.s32.totalorder %s21, 1
    %p191 = por %p189, %p190
    %p193 = scmp.ne.s32.totalorder %s178, %s192
    %p194 = scmp.eq.s32.totalorder %s21, 0
    %p195 = por %p193, %p194
    %s197 = sadd.s32 %s196, 1
    %p200 = scmp.eq.s32.totalorder %s15, 1
    %p201 = scmp.ne.s32.totalorder %s196, %s198
    %p202 = scmp.eq.s32.totalorder %s15, 0
    %p203 = por %p201, %p202
    %p204 = scmp.ne.s32.totalorder %s196, %s198
    %p205 = scmp.eq.s32.totalorder %s20, 1
    %p206 = por %p204, %p205
    %p207 = scmp.ne.s32.totalorder %s198, %s199
    %p208 = scmp.eq.s32.totalorder %s20, 0
    %p209 = por %p207, %p208
    %p210 = scmp.ne.s32.totalorder %s198, %s199
    %p211 = scmp.eq.s32.totalorder %s21, 1
    %p212 = por %p210, %p211
    %p214 = scmp.ne.s32.totalorder %s199, %s213
    %p215 = scmp.eq.s32.totalorder %s21, 0
    %p216 = por %p214, %p215
    %s217 = ssub.s32 %s15, %s22
    %p218 = scmp.eq.s32.totalorder %s217, 0
    %s220 = sadd.s32 %s219, 1
    %s221 = scalar_select %p218, %s219, %s220
    %p224 = pneg %p218
    %p225 = scmp.eq.s32.totalorder %s15, 1
    %p226 = por %p224, %p225
    %p227 = scmp.ne.s32.totalorder %s219, %s222
    %p228 = scmp.eq.s32.totalorder %s15, 0
    %p229 = por %p227, %p228
    %p230 = scmp.ne.s32.totalorder %s219, %s222
    %p231 = scmp.eq.s32.totalorder %s20, 1
    %p232 = por %p230, %p231
    %p233 = scmp.ne.s32.totalorder %s222, %s223
    %p234 = scmp.eq.s32.totalorder %s20, 0
    %p235 = por %p233, %p234
    %p236 = scmp.ne.s32.totalorder %s222, %s223
    %p237 = scmp.eq.s32.totalorder %s21, 1
    %p238 = por %p236, %p237
    %p240 = scmp.ne.s32.totalorder %s223, %s239
    %p241 = scmp.eq.s32.totalorder %s21, 0
    %p242 = por %p240, %p241
    %p243 = scmp.le.s32.totalorder 1, %s15
    %p244 = scmp.lt.s32.totalorder %s15, 3
    %p245 = pnand %p243, %p244
    %p246 = pneg %p245
    // Predicated region
    $region9: #{discriminator_forward.3} parent=5 // pred_check
      _
    $region10: #{discriminator_forward.3} parent=5 // pred_check_branch
      %248 = sbr.rel (%p245) target = $region12
    $region11: #{discriminator_forward.3} parent=5 // pred_region
      %s249 = ssub.s32 %s15, 1
      // Predicated region
      $region13: #{discriminator_forward.3} parent=11 // pred_check
        %p250 = pneg %p62
      $region14: #{discriminator_forward.3} parent=11 // pred_check_branch
        %252 = sbr.rel (%p250) target = $region16
      $region15: #{discriminator_forward.3} parent=11 // pred_region
        _
      $region16: #{discriminator_forward.3} parent=11 // pred_fallthru
        _
      // Predicated region
      $region17: #{discriminator_forward.3} parent=11 // pred_check
        %p253 = pneg %p83
      $region18: #{discriminator_forward.3} parent=11 // pred_check_branch
        %255 = sbr.rel (%p253) target = $region20
      $region19: #{discriminator_forward.3} parent=11 // pred_region
        _
      $region20: #{discriminator_forward.3} parent=11 // pred_fallthru
        _
      // Predicated region
      $region21: #{discriminator_forward.3} parent=11 // pred_check
        %p256 = pneg %p104
      $region22: #{discriminator_forward.3} parent=11 // pred_check_branch
        %258 = sbr.rel (%p256) target = $region24
      $region23: #{discriminator_forward.3} parent=11 // pred_region
        _
      $region24: #{discriminator_forward.3} parent=11 // pred_fallthru
        _
      // Predicated region
      $region25: #{discriminator_forward.3} parent=11 // pred_check
        %p259 = pneg %p125
      $region26: #{discriminator_forward.3} parent=11 // pred_check_branch
        %261 = sbr.rel (%p259) target = $region28
      $region27: #{discriminator_forward.3} parent=11 // pred_region
        _
      $region28: #{discriminator_forward.3} parent=11 // pred_fallthru
        _
      // Predicated region
      $region29: #{discriminator_forward.3} parent=11 // pred_check
        %p262 = pneg %p146
      $region30: #{discriminator_forward.3} parent=11 // pred_check_branch
        %264 = sbr.rel (%p262) target = $region32
      $region31: #{discriminator_forward.3} parent=11 // pred_region
        _
      $region32: #{discriminator_forward.3} parent=11 // pred_fallthru
        _
      // Predicated region
      $region33: #{discriminator_forward.3} parent=11 // pred_check
        %p265 = pneg %p167
      $region34: #{discriminator_forward.3} parent=11 // pred_check_branch
        %267 = sbr.rel (%p265) target = $region36
      $region35: #{discriminator_forward.3} parent=11 // pred_region
        _
      $region36: #{discriminator_forward.3} parent=11 // pred_fallthru
        _
      // Predicated region
      $region37: #{discriminator_forward.3} parent=11 // pred_check
        %p268 = pneg %p188
      $region38: #{discriminator_forward.3} parent=11 // pred_check_branch
        %270 = sbr.rel (%p268) target = $region40
      $region39: #{discriminator_forward.3} parent=11 // pred_region
        _
      $region40: #{discriminator_forward.3} parent=11 // pred_fallthru
        _
      // Predicated region
      $region41: #{discriminator_forward.3} parent=11 // pred_check
        %p271 = pneg %p209
      $region42: #{discriminator_forward.3} parent=11 // pred_check_branch
        %273 = sbr.rel (%p271) target = $region44
      $region43: #{discriminator_forward.3} parent=11 // pred_region
        _
      $region44: #{discriminator_forward.3} parent=11 // pred_fallthru
        _
    $region12: #{discriminator_forward.3} parent=5 // pred_fallthru
      _
    %p274 = scmp.lt.s32.totalorder %s15, 2
    // Predicated region
    $region45: #{discriminator_forward.3} parent=5 // pred_check
      %p275 = pneg %p274
    $region46: #{discriminator_forward.3} parent=5 // pred_check_branch
      %277 = sbr.rel (%p275) target = $region48
    $region47: #{discriminator_forward.3} parent=5 // pred_region
      // Predicated region
      $region49: #{discriminator_forward.3} parent=47 // pred_check
        %p278 = pneg %p35
      $region50: #{discriminator_forward.3} parent=47 // pred_check_branch
        %280 = sbr.rel (%p278) target = $region52
      $region51: #{discriminator_forward.3} parent=47 // pred_region
        %p281 = scmp.lt.s32.totalorder %s15, 1
        %s282 = scalar_select %p281, %s15, 1
        %s283 = smul.addr %s282, 8
        %s284 = smul.addr %s283, 4
        %s285 = scalar_lea.vmem %s0, %s284
      $region52: #{discriminator_forward.3} parent=47 // pred_fallthru
        _
    $region48: #{discriminator_forward.3} parent=5 // pred_fallthru
      _
    %p286 = scmp.le.s32.totalorder 1, %s15
    %p287 = scmp.lt.s32.totalorder %s15, 3
    %p288 = pnand %p286, %p287
    %p289 = pneg %p288
    // Predicated region
    $region53: #{discriminator_forward.3} parent=5 // pred_check
      _
    $region54: #{discriminator_forward.3} parent=5 // pred_check_branch
      %291 = sbr.rel (%p288) target = $region56
    $region55: #{discriminator_forward.3} parent=5 // pred_region
      %s292 = ssub.s32 %s15, 1
      %p293 = scmp.lt.s32.totalorder %s20, 1
      %s294 = scalar_select %p293, %s20, 1
      %s295 = smul.addr %s294, 8
      %s296 = smul.addr %s295, 4
      %s297 = scalar_lea.vmem %s0, %s296
      %p298 = pneg %p41
      %p299 = pneg %p38
      %p300 = pneg %p62
      %p301 = pneg %p59
      %p302 = pneg %p83
      %p303 = pneg %p80
      %p304 = pneg %p104
      %p305 = pneg %p101
      %p306 = pneg %p125
      %p307 = pneg %p122
      %p308 = pneg %p146
      %p309 = pneg %p143
      %p310 = pneg %p167
      %p311 = pneg %p164
      %p312 = pneg %p188
      %p313 = pneg %p185
      %p314 = pneg %p209
      %p315 = pneg %p206
      %p316 = pneg %p235
      %p317 = pneg %p232
      %p318 = scmp.lt.s32.totalorder %s20, 1
      %s319 = scalar_select %p318, %s20, 1
      %s320 = scalar_lea.vmem %s9, %s319
      %p321 = scmp.lt.s32.totalorder %s20, 1
      %s322 = scalar_select %p321, %s20, 1
      %s323 = smul.addr %s322, 8
      %s324 = smul.addr %s323, 4
      %s325 = scalar_lea.vmem %s0, %s324
      %p326 = scmp.lt.s32.totalorder %s20, 1
      %s327 = scalar_select %p326, %s20, 1
      %s328 = scalar_lea.vmem %s9, %s327
      %v330 = vld [vmem:[%s325] sm:$0xff]
      %v331 = vld [vmem:[%s325 + $0x8] sm:$0xff]
      %v332 = vld [vmem:[%s325 + $0x10] sm:$0xff]
      %v333 = vld [vmem:[%s325 + $0x18] sm:$0xff]
      %v334 = vld [vmem:[%s1] sm:$0xf]
      %v335 = vld [vmem:[%s1 + $0x4] sm:$0xf]
      %v336 = vld [vmem:[%s1 + $0x8] sm:$0xf]
      %v337 = vld [vmem:[%s1 + $0xc] sm:$0xf]
      %v338 = vld [vmem:[%s1 + $0x10] sm:$0xf]
      %v339 = vld [vmem:[%s1 + $0x14] sm:$0xf]
      %v340 = vld [vmem:[%s1 + $0x18] sm:$0xf]
      %v341 = vld [vmem:[%s1 + $0x1c] sm:$0xf]
      %v342 = vld [vmem:[%s1 + $0x20] sm:$0xf]
      %v343 = vld [vmem:[%s1 + $0x24] sm:$0xf]
      %v344 = vld [vmem:[%s1 + $0x28] sm:$0xf]
      %v345 = vld [vmem:[%s1 + $0x2c] sm:$0xf]
      %v346 = vld [vmem:[%s1 + $0x30] sm:$0xf]
      %v347 = vld [vmem:[%s1 + $0x34] sm:$0xf]
      %v348 = vld [vmem:[%s1 + $0x38] sm:$0xf]
      %v349 = vld [vmem:[%s1 + $0x3c] sm:$0xf]
      %v350 = vld [vmem:[%s1 + $0x40] sm:$0xf]
      %v351 = vld [vmem:[%s1 + $0x44] sm:$0xf]
      %v352 = vld [vmem:[%s1 + $0x48] sm:$0xf]
      %v353 = vld [vmem:[%s1 + $0x4c] sm:$0xf]
      %v354 = vld [vmem:[%s1 + $0x50] sm:$0xf]
      %v355 = vld [vmem:[%s1 + $0x54] sm:$0xf]
      %v356 = vld [vmem:[%s1 + $0x58] sm:$0xf]
      %v357 = vld [vmem:[%s1 + $0x5c] sm:$0xf]
      %v358 = vld [vmem:[%s1 + $0x60] sm:$0xf]
      %v359 = vld [vmem:[%s1 + $0x64] sm:$0xf]
      %v360 = vld [vmem:[%s1 + $0x68] sm:$0xf]
      %v361 = vld [vmem:[%s1 + $0x6c] sm:$0xf]
      %v362 = vld [vmem:[%s1 + $0x70] sm:$0xf]
      %v363 = vld [vmem:[%s1 + $0x74] sm:$0xf]
      %v364 = vld [vmem:[%s1 + $0x78] sm:$0xf]
      %v365 = vld [vmem:[%s1 + $0x7c] sm:$0xf]
      %v366 = vld [vmem:[%s1 + $0x80] sm:$0xf]
      %v367 = vld [vmem:[%s1 + $0x84] sm:$0xf]
      %v368 = vld [vmem:[%s1 + $0x88] sm:$0xf]
      %v369 = vld [vmem:[%s1 + $0x8c] sm:$0xf]
      %v370 = vld [vmem:[%s1 + $0x90] sm:$0xf]
      %v371 = vld [vmem:[%s1 + $0x94] sm:$0xf]
      %v372 = vld [vmem:[%s1 + $0x98] sm:$0xf]
      %v373 = vld [vmem:[%s1 + $0x9c] sm:$0xf]
      %v374 = vld [vmem:[%s1 + $0xa0] sm:$0xf]
      %v375 = vld [vmem:[%s1 + $0xa4] sm:$0xf]
      %v376 = vld [vmem:[%s1 + $0xa8] sm:$0xf]
      %v377 = vld [vmem:[%s1 + $0xac] sm:$0xf]
      %v378 = vld [vmem:[%s1 + $0xb0] sm:$0xf]
      %v379 = vld [vmem:[%s1 + $0xb4] sm:$0xf]
      %v380 = vld [vmem:[%s1 + $0xb8] sm:$0xf]
      %v381 = vld [vmem:[%s1 + $0xbc] sm:$0xf]
      %v382 = vld [vmem:[%s1 + $0xc0] sm:$0xf]
      %v383 = vld [vmem:[%s1 + $0xc4] sm:$0xf]
      %v384 = vld [vmem:[%s1 + $0xc8] sm:$0xf]
      %v385 = vld [vmem:[%s1 + $0xcc] sm:$0xf]
      %v386 = vld [vmem:[%s1 + $0xd0] sm:$0xf]
      %v387 = vld [vmem:[%s1 + $0xd4] sm:$0xf]
      %v388 = vld [vmem:[%s1 + $0xd8] sm:$0xf]
      %v389 = vld [vmem:[%s1 + $0xdc] sm:$0xf]
      %v390 = vld [vmem:[%s1 + $0xe0] sm:$0xf]
      %v391 = vld [vmem:[%s1 + $0xe4] sm:$0xf]
      %v392 = vld [vmem:[%s1 + $0xe8] sm:$0xf]
      %v393 = vld [vmem:[%s1 + $0xec] sm:$0xf]
      %v394 = vld [vmem:[%s1 + $0xf0] sm:$0xf]
      %v395 = vld [vmem:[%s1 + $0xf4] sm:$0xf]
      %v396 = vld [vmem:[%s1 + $0xf8] sm:$0xf]
      %v397 = vld [vmem:[%s1 + $0xfc] sm:$0xf]
      %v398 = vld [vmem:[%s2] sm:$0x1]
      %v400 = vlaneseq
      %v401 = vshrl.u32 %v400, 7
      %v402 = vsub.s32 0, %v401
      %v403 = vrot.slane %v398, %v402
      %v409 = vunpack.c.l.b16 %v330
      %v410 = vunpack.c.h.b16 %v330
      %v411 = vunpack.c.l.b16 %v331
      %v412 = vunpack.c.h.b16 %v331
      %v413 = vunpack.c.l.b16 %v332
      %v414 = vunpack.c.h.b16 %v332
      %v415 = vunpack.c.l.b16 %v333
      %v416 = vunpack.c.h.b16 %v333
      %v417 = vpack.c.b16 %v413, %v409
      %v418 = vpack.c.b16 %v414, %v410
      %v419 = vpack.c.b16 %v415, %v411
      %v420 = vpack.c.b16 %v416, %v412
      %v489 = vunpack.c.l.b16 %v334
      %v490 = vunpack.c.l.b16 %v335
      %v491 = vunpack.c.l.b16 %v336
      %v492 = vunpack.c.l.b16 %v337
      %v493 = vunpack.c.l.b16 %v338
      %v494 = vunpack.c.l.b16 %v339
      %v495 = vunpack.c.l.b16 %v340
      %v496 = vunpack.c.l.b16 %v341
      %v497 = vunpack.c.l.b16 %v342
      %v498 = vunpack.c.l.b16 %v343
      %v499 = vunpack.c.l.b16 %v344
      %v500 = vunpack.c.l.b16 %v345
      %v501 = vunpack.c.l.b16 %v346
      %v502 = vunpack.c.l.b16 %v347
      %v503 = vunpack.c.l.b16 %v348
      %v504 = vunpack.c.l.b16 %v349
      %v505 = vunpack.c.l.b16 %v350
      %v506 = vunpack.c.l.b16 %v351
      %v507 = vunpack.c.l.b16 %v352
      %v508 = vunpack.c.l.b16 %v353
      %v509 = vunpack.c.l.b16 %v354
      %v510 = vunpack.c.l.b16 %v355
      %v511 = vunpack.c.l.b16 %v356
      %v512 = vunpack.c.l.b16 %v357
      %v513 = vunpack.c.l.b16 %v358
      %v514 = vunpack.c.l.b16 %v359
      %v515 = vunpack.c.l.b16 %v360
      %v516 = vunpack.c.l.b16 %v361
      %v517 = vunpack.c.l.b16 %v362
      %v518 = vunpack.c.l.b16 %v363
      %v519 = vunpack.c.l.b16 %v364
      %v520 = vunpack.c.l.b16 %v365
      %v521 = vunpack.c.l.b16 %v366
      %v522 = vunpack.c.l.b16 %v367
      %v523 = vunpack.c.l.b16 %v368
      %v524 = vunpack.c.l.b16 %v369
      %v525 = vunpack.c.l.b16 %v370
      %v526 = vunpack.c.l.b16 %v371
      %v527 = vunpack.c.l.b16 %v372
      %v528 = vunpack.c.l.b16 %v373
      %v529 = vunpack.c.l.b16 %v374
      %v530 = vunpack.c.l.b16 %v375
      %v531 = vunpack.c.l.b16 %v376
      %v532 = vunpack.c.l.b16 %v377
      %v533 = vunpack.c.l.b16 %v378
      %v534 = vunpack.c.l.b16 %v379
      %v535 = vunpack.c.l.b16 %v380
      %v536 = vunpack.c.l.b16 %v381
      %v537 = vunpack.c.l.b16 %v382
      %v538 = vunpack.c.l.b16 %v383
      %v539 = vunpack.c.l.b16 %v384
      %v540 = vunpack.c.l.b16 %v385
      %v541 = vunpack.c.l.b16 %v386
      %v542 = vunpack.c.l.b16 %v387
      %v543 = vunpack.c.l.b16 %v388
      %v544 = vunpack.c.l.b16 %v389
      %v545 = vunpack.c.l.b16 %v390
      %v546 = vunpack.c.l.b16 %v391
      %v547 = vunpack.c.l.b16 %v392
      %v548 = vunpack.c.l.b16 %v393
      %v549 = vunpack.c.l.b16 %v394
      %v550 = vunpack.c.l.b16 %v395
      %v551 = vunpack.c.l.b16 %v396
      %v552 = vunpack.c.l.b16 %v397
      %v553 = vpack.c.b16 %v490, %v489
      %v554 = vpack.c.b16 %v492, %v491
      %v555 = vpack.c.b16 %v494, %v493
      %v556 = vpack.c.b16 %v496, %v495
      %v557 = vpack.c.b16 %v498, %v497
      %v558 = vpack.c.b16 %v500, %v499
      %v559 = vpack.c.b16 %v502, %v501
      %v560 = vpack.c.b16 %v504, %v503
      %v561 = vpack.c.b16 %v506, %v505
      %v562 = vpack.c.b16 %v508, %v507
      %v563 = vpack.c.b16 %v510, %v509
      %v564 = vpack.c.b16 %v512, %v511
      %v565 = vpack.c.b16 %v514, %v513
      %v566 = vpack.c.b16 %v516, %v515
      %v567 = vpack.c.b16 %v518, %v517
      %v568 = vpack.c.b16 %v520, %v519
      %v569 = vpack.c.b16 %v522, %v521
      %v570 = vpack.c.b16 %v524, %v523
      %v571 = vpack.c.b16 %v526, %v525
      %v572 = vpack.c.b16 %v528, %v527
      %v573 = vpack.c.b16 %v530, %v529
      %v574 = vpack.c.b16 %v532, %v531
      %v575 = vpack.c.b16 %v534, %v533
      %v576 = vpack.c.b16 %v536, %v535
      %v577 = vpack.c.b16 %v538, %v537
      %v578 = vpack.c.b16 %v540, %v539
      %v579 = vpack.c.b16 %v542, %v541
      %v580 = vpack.c.b16 %v544, %v543
      %v581 = vpack.c.b16 %v546, %v545
      %v582 = vpack.c.b16 %v548, %v547
      %v583 = vpack.c.b16 %v550, %v549
      %v584 = vpack.c.b16 %v552, %v551
      %617 = vmatprep.subr.bf16.mxu0 0
      %618 = vmatpush1.bf16.msra.mxu0 %v553
      %619 = vmatprep.subr.bf16.mxu0 0
      %620 = vmatpush1.bf16.msra.mxu0 %v554
      %621 = vmatprep.subr.bf16.mxu0 0
      %622 = vmatpush1.bf16.msra.mxu0 %v555
      %623 = vmatprep.subr.bf16.mxu0 0
      %624 = vmatpush1.bf16.msra.mxu0 %v556
      %625 = vmatprep.subr.bf16.mxu0 0
      %626 = vmatpush1.bf16.msra.mxu0 %v557
      %627 = vmatprep.subr.bf16.mxu0 0
      %628 = vmatpush1.bf16.msra.mxu0 %v558
      %629 = vmatprep.subr.bf16.mxu0 0
      %630 = vmatpush1.bf16.msra.mxu0 %v559
      %631 = vmatprep.subr.bf16.mxu0 0
      %632 = vmatpush1.bf16.msra.mxu0 %v560
      %633 = vmatprep.subr.bf16.mxu0 0
      %634 = vmatpush1.bf16.msra.mxu0 %v561
      %635 = vmatprep.subr.bf16.mxu0 0
      %636 = vmatpush1.bf16.msra.mxu0 %v562
      %637 = vmatprep.subr.bf16.mxu0 0
      %638 = vmatpush1.bf16.msra.mxu0 %v563
      %639 = vmatprep.subr.bf16.mxu0 0
      %640 = vmatpush1.bf16.msra.mxu0 %v564
      %641 = vmatprep.subr.bf16.mxu0 0
      %642 = vmatpush1.bf16.msra.mxu0 %v565
      %643 = vmatprep.subr.bf16.mxu0 0
      %644 = vmatpush1.bf16.msra.mxu0 %v566
      %645 = vmatprep.subr.bf16.mxu0 0
      %646 = vmatpush1.bf16.msra.mxu0 %v567
      %647 = vmatprep.subr.bf16.mxu0 0
      %648 = vmatpush1.bf16.msra.mxu0 %v568
      %649 = vmatprep.mubr.bf16.mxu0 %v418
      %650 = vmatmul.mubr.bf16.gmra.mrb[0].mxu0 %v417
      %v651 = vpop.f32.mrb[0].mxu0
      %v652 = vadd.f32 %v403, %v651
      %v653 = vpop.f32.mrb[0].mxu0
      %v654 = vpop.f32.mrb[0].mxu0
      %v655 = vadd.f32 %v403, %v654
      %v656 = vpop.f32.mrb[0].mxu0
      %657 = vdwg.mxu0
      %658 = vmatprep.subr.bf16.mxu0 0
      %659 = vmatpush1.bf16.msra.mxu0 %v569
      %660 = vmatprep.subr.bf16.mxu0 0
      %661 = vmatpush1.bf16.msra.mxu0 %v570
      %662 = vmatprep.subr.bf16.mxu0 0
      %663 = vmatpush1.bf16.msra.mxu0 %v571
      %664 = vmatprep.subr.bf16.mxu0 0
      %665 = vmatpush1.bf16.msra.mxu0 %v572
      %666 = vmatprep.subr.bf16.mxu0 0
      %667 = vmatpush1.bf16.msra.mxu0 %v573
      %668 = vmatprep.subr.bf16.mxu0 0
      %669 = vmatpush1.bf16.msra.mxu0 %v574
      %670 = vmatprep.subr.bf16.mxu0 0
      %671 = vmatpush1.bf16.msra.mxu0 %v575
      %672 = vmatprep.subr.bf16.mxu0 0
      %673 = vmatpush1.bf16.msra.mxu0 %v576
      %674 = vmatprep.subr.bf16.mxu0 0
      %675 = vmatpush1.bf16.msra.mxu0 %v577
      %676 = vmatprep.subr.bf16.mxu0 0
      %677 = vmatpush1.bf16.msra.mxu0 %v578
      %678 = vmatprep.subr.bf16.mxu0 0
      %679 = vmatpush1.bf16.msra.mxu0 %v579
      %680 = vmatprep.subr.bf16.mxu0 0
      %681 = vmatpush1.bf16.msra.mxu0 %v580
      %682 = vmatprep.subr.bf16.mxu0 0
      %683 = vmatpush1.bf16.msra.mxu0 %v581
      %684 = vmatprep.subr.bf16.mxu0 0
      %685 = vmatpush1.bf16.msra.mxu0 %v582
      %686 = vmatprep.subr.bf16.mxu0 0
      %687 = vmatpush1.bf16.msra.mxu0 %v583
      %688 = vmatprep.subr.bf16.mxu0 0
      %689 = vmatpush1.bf16.msra.mxu0 %v584
      %690 = vmatprep.mubr.bf16.mxu0 %v420
      %691 = vmatmul.mubr.bf16.gmra.mrb[0].mxu0 %v419
      %v692 = vpop.f32.mrb[0].mxu0
      %v693 = vadd.f32 %v652, %v692
      %v694 = vpop.f32.mrb[0].mxu0
      %v695 = vpop.f32.mrb[0].mxu0
      %v696 = vadd.f32 %v655, %v695
      %v697 = vpop.f32.mrb[0].mxu0
      %698 = vdwg.mxu0
      %v699 = vadd.f32 %v693, %v696
      %v700 = vrot.slane %v699, 4
      %v701 = vadd.f32 %v699, %v700
      %v702 = vrot.slane %v701, 2
      %v703 = vadd.f32 %v701, %v702
      %v704 = vrot.slane %v703, 1
      %v705 = vadd.f32 %v703, %v704
      %v706 = vmul.f32 %v693, %v693
      %v707 = vmul.f32 %v696, %v696
      %v708 = vadd.f32 %v706, %v707
      %v709 = vrot.slane %v708, 4
      %v710 = vadd.f32 %v708, %v709
      %v711 = vrot.slane %v710, 2
      %v712 = vadd.f32 %v710, %v711
      %v713 = vrot.slane %v712, 1
      %v714 = vadd.f32 %v712, %v713
      %v715 = vld [vmem:[%s5] sm:$0xff]
      %v716 = vld [vmem:[%s5 + $0x8] sm:$0xff]
      %v717 = vld [vmem:[%s5 + $0x10] sm:$0xff]
      %v718 = vld [vmem:[%s5 + $0x18] sm:$0xff]
      %v719 = vld [vmem:[%s5 + $0x20] sm:$0xff]
      %v720 = vld [vmem:[%s5 + $0x28] sm:$0xff]
      %v721 = vld [vmem:[%s5 + $0x30] sm:$0xff]
      %v722 = vld [vmem:[%s5 + $0x38] sm:$0xff]
      %v723 = vld [vmem:[%s5 + $0x40] sm:$0xff]
      %v724 = vld [vmem:[%s5 + $0x48] sm:$0xff]
      %v725 = vld [vmem:[%s5 + $0x50] sm:$0xff]
      %v726 = vld [vmem:[%s5 + $0x58] sm:$0xff]
      %v727 = vld [vmem:[%s5 + $0x60] sm:$0xff]
      %v728 = vld [vmem:[%s5 + $0x68] sm:$0xff]
      %v729 = vld [vmem:[%s5 + $0x70] sm:$0xff]
      %v730 = vld [vmem:[%s5 + $0x78] sm:$0xff]
      %731 = vmatprep.subr.mxu0 0.0
      %732 = vmatpush1.msra.mxu0 %v715
      %733 = vmatprep.subr.mxu0 0.0
      %734 = vmatpush1.msra.mxu0 %v716
      %735 = vmatprep.subr.mxu0 0.0
      %736 = vmatpush1.msra.mxu0 %v717
      %737 = vmatprep.subr.mxu0 0.0
      %738 = vmatpush1.msra.mxu0 %v718
      %739 = vmatprep.subr.mxu0 0.0
      %740 = vmatpush1.msra.mxu0 %v719
      %741 = vmatprep.subr.mxu0 0.0
      %742 = vmatpush1.msra.mxu0 %v720
      %743 = vmatprep.subr.mxu0 0.0
      %744 = vmatpush1.msra.mxu0 %v721
      %745 = vmatprep.subr.mxu0 0.0
      %746 = vmatpush1.msra.mxu0 %v722
      %747 = vmatprep.subr.mxu0 0.0
      %748 = vmatpush1.msra.mxu0 %v723
      %749 = vmatprep.subr.mxu0 0.0
      %750 = vmatpush1.msra.mxu0 %v724
      %751 = vmatprep.subr.mxu0 0.0
      %752 = vmatpush1.msra.mxu0 %v725
      %753 = vmatprep.subr.mxu0 0.0
      %754 = vmatpush1.msra.mxu0 %v726
      %755 = vmatprep.subr.mxu0 0.0
      %756 = vmatpush1.msra.mxu0 %v727
      %757 = vmatprep.subr.mxu0 0.0
      %758 = vmatpush1.msra.mxu0 %v728
      %759 = vmatprep.subr.mxu0 0.0
      %760 = vmatpush1.msra.mxu0 %v729
      %761 = vmatprep.subr.mxu0 0.0
      %762 = vmatpush1.msra.mxu0 %v730
      %763 = vmatprep.subr.mxu0 0.0
      %764 = vmatpush1.msra.mxu0 0.0
      %765 = vmatprep.subr.mxu0 0.0
      %766 = vmatpush1.msra.mxu0 0.0
      %767 = vmatprep.subr.mxu0 0.0
      %768 = vmatpush1.msra.mxu0 0.0
      %769 = vmatprep.subr.mxu0 0.0
      %770 = vmatpush1.msra.mxu0 0.0
      %771 = vmatprep.subr.mxu0 0.0
      %772 = vmatpush1.msra.mxu0 0.0
      %773 = vmatprep.subr.mxu0 0.0
      %774 = vmatpush1.msra.mxu0 0.0
      %775 = vmatprep.subr.mxu0 0.0
      %776 = vmatpush1.msra.mxu0 0.0
      %777 = vmatprep.subr.mxu0 0.0
      %778 = vmatpush1.msra.mxu0 0.0
      %779 = vmatprep.subr.mxu0 0.0
      %780 = vmatpush1.msra.mxu0 0.0
      %781 = vmatprep.subr.mxu0 0.0
      %782 = vmatpush1.msra.mxu0 0.0
      %783 = vmatprep.subr.mxu0 0.0
      %784 = vmatpush1.msra.mxu0 0.0
      %785 = vmatprep.subr.mxu0 0.0
      %786 = vmatpush1.msra.mxu0 0.0
      %787 = vmatprep.subr.mxu0 0.0
      %788 = vmatpush1.msra.mxu0 0.0
      %789 = vmatprep.subr.mxu0 0.0
      %790 = vmatpush1.msra.mxu0 0.0
      %791 = vmatprep.subr.mxu0 0.0
      %792 = vmatpush1.msra.mxu0 0.0
      %793 = vmatprep.subr.mxu0 0.0
      %794 = vmatpush1.msra.mxu0 0.0
      %795 = vmatprep.mubr.f32.mxu0 0.0
      %796 = vmatmul.mubr.f32.gmra.mrb[0].mxu0 %v705
      %v797 = vpop.f32.mrb[0].mxu0
      %v798 = vadd.f32 0.0, %v797
      %v799 = vpop.f32.mrb[0].mxu0
      %800 = vdwg.mxu0
      %801 = vmatprep.subr.mxu0 0.0
      %802 = vmatpush1.msra.mxu0 %v715
      %803 = vmatprep.subr.mxu0 0.0
      %804 = vmatpush1.msra.mxu0 %v716
      %805 = vmatprep.subr.mxu0 0.0
      %806 = vmatpush1.msra.mxu0 %v717
      %807 = vmatprep.subr.mxu0 0.0
      %808 = vmatpush1.msra.mxu0 %v718
      %809 = vmatprep.subr.mxu0 0.0
      %810 = vmatpush1.msra.mxu0 %v719
      %811 = vmatprep.subr.mxu0 0.0
      %812 = vmatpush1.msra.mxu0 %v720
      %813 = vmatprep.subr.mxu0 0.0
      %814 = vmatpush1.msra.mxu0 %v721
      %815 = vmatprep.subr.mxu0 0.0
      %816 = vmatpush1.msra.mxu0 %v722
      %817 = vmatprep.subr.mxu0 0.0
      %818 = vmatpush1.msra.mxu0 %v723
      %819 = vmatprep.subr.mxu0 0.0
      %820 = vmatpush1.msra.mxu0 %v724
      %821 = vmatprep.subr.mxu0 0.0
      %822 = vmatpush1.msra.mxu0 %v725
      %823 = vmatprep.subr.mxu0 0.0
      %824 = vmatpush1.msra.mxu0 %v726
      %825 = vmatprep.subr.mxu0 0.0
      %826 = vmatpush1.msra.mxu0 %v727
      %827 = vmatprep.subr.mxu0 0.0
      %828 = vmatpush1.msra.mxu0 %v728
      %829 = vmatprep.subr.mxu0 0.0
      %830 = vmatpush1.msra.mxu0 %v729
      %831 = vmatprep.subr.mxu0 0.0
      %832 = vmatpush1.msra.mxu0 %v730
      %833 = vmatprep.subr.mxu0 0.0
      %834 = vmatpush1.msra.mxu0 0.0
      %835 = vmatprep.subr.mxu0 0.0
      %836 = vmatpush1.msra.mxu0 0.0
      %837 = vmatprep.subr.mxu0 0.0
      %838 = vmatpush1.msra.mxu0 0.0
      %839 = vmatprep.subr.mxu0 0.0
      %840 = vmatpush1.msra.mxu0 0.0
      %841 = vmatprep.subr.mxu0 0.0
      %842 = vmatpush1.msra.mxu0 0.0
      %843 = vmatprep.subr.mxu0 0.0
      %844 = vmatpush1.msra.mxu0 0.0
      %845 = vmatprep.subr.mxu0 0.0
      %846 = vmatpush1.msra.mxu0 0.0
      %847 = vmatprep.subr.mxu0 0.0
      %848 = vmatpush1.msra.mxu0 0.0
      %849 = vmatprep.subr.mxu0 0.0
      %850 = vmatpush1.msra.mxu0 0.0
      %851 = vmatprep.subr.mxu0 0.0
      %852 = vmatpush1.msra.mxu0 0.0
      %853 = vmatprep.subr.mxu0 0.0
      %854 = vmatpush1.msra.mxu0 0.0
      %855 = vmatprep.subr.mxu0 0.0
      %856 = vmatpush1.msra.mxu0 0.0
      %857 = vmatprep.subr.mxu0 0.0
      %858 = vmatpush1.msra.mxu0 0.0
      %859 = vmatprep.subr.mxu0 0.0
      %860 = vmatpush1.msra.mxu0 0.0
      %861 = vmatprep.subr.mxu0 0.0
      %862 = vmatpush1.msra.mxu0 0.0
      %863 = vmatprep.subr.mxu0 0.0
      %864 = vmatpush1.msra.mxu0 0.0
      %865 = vmatprep.mubr.f32.mxu0 0.0
      %866 = vmatmul.mubr.f32.gmra.mrb[0].mxu0 %v714
      %v867 = vpop.f32.mrb[0].mxu0
      %v868 = vadd.f32 0.0, %v867
      %v869 = vpop.f32.mrb[0].mxu0
      %870 = vdwg.mxu0
      %v871 = vrcp.pop 64.0
      %v872 = vmul.f32 %v798, %v871
      %v873 = vmul.f32 %v868, %v871
      %v874 = vmul.f32 %v872, %v872
      %v875 = vsub.f32 %v873, %v874
      %v876 = vadd.f32 %v875, 1e-05
      %v877 = vrsqrt.pop %v876
      %v878 = vld [vmem:[%s6] sm:$0xff]
      %v879 = vld [vmem:[%s6 + $0x8] sm:$0xff]
      %vm880 = vcmask 130048
      %v882 = vsel %vm880, %v872, 0
      %884 = vmatprep.subr.mxu0 0.0
      %885 = vmatpush1.msra.mxu0 %v878
      %886 = vmatprep.subr.mxu0 0.0
      %887 = vmatpush1.msra.mxu0 %v879
      %888 = vmatprep.subr.mxu0 0.0
      %889 = vmatpush1.msra.mxu0 0.0
      %890 = vmatprep.subr.mxu0 0.0
      %891 = vmatpush1.msra.mxu0 0.0
      %892 = vmatprep.subr.mxu0 0.0
      %893 = vmatpush1.msra.mxu0 0.0
      %894 = vmatprep.subr.mxu0 0.0
      %895 = vmatpush1.msra.mxu0 0.0
      %896 = vmatprep.subr.mxu0 0.0
      %897 = vmatpush1.msra.mxu0 0.0
      %898 = vmatprep.subr.mxu0 0.0
      %899 = vmatpush1.msra.mxu0 0.0
      %900 = vmatprep.subr.mxu0 0.0
      %901 = vmatpush1.msra.mxu0 0.0
      %902 = vmatprep.subr.mxu0 0.0
      %903 = vmatpush1.msra.mxu0 0.0
      %904 = vmatprep.subr.mxu0 0.0
      %905 = vmatpush1.msra.mxu0 0.0
      %906 = vmatprep.subr.mxu0 0.0
      %907 = vmatpush1.msra.mxu0 0.0
      %908 = vmatprep.subr.mxu0 0.0
      %909 = vmatpush1.msra.mxu0 0.0
      %910 = vmatprep.subr.mxu0 0.0
      %911 = vmatpush1.msra.mxu0 0.0
      %912 = vmatprep.subr.mxu0 0.0
      %913 = vmatpush1.msra.mxu0 0.0
      %914 = vmatprep.subr.mxu0 0.0
      %915 = vmatpush1.msra.mxu0 0.0
      %916 = vmatprep.subr.mxu0 0.0
      %917 = vmatpush1.msra.mxu0 0.0
      %918 = vmatprep.subr.mxu0 0.0
      %919 = vmatpush1.msra.mxu0 0.0
      %920 = vmatprep.subr.mxu0 0.0
      %921 = vmatpush1.msra.mxu0 0.0
      %922 = vmatprep.subr.mxu0 0.0
      %923 = vmatpush1.msra.mxu0 0.0
      %924 = vmatprep.subr.mxu0 0.0
      %925 = vmatpush1.msra.mxu0 0.0
      %926 = vmatprep.subr.mxu0 0.0
      %927 = vmatpush1.msra.mxu0 0.0
      %928 = vmatprep.subr.mxu0 0.0
      %929 = vmatpush1.msra.mxu0 0.0
      %930 = vmatprep.subr.mxu0 0.0
      %931 = vmatpush1.msra.mxu0 0.0
      %932 = vmatprep.subr.mxu0 0.0
      %933 = vmatpush1.msra.mxu0 0.0
      %934 = vmatprep.subr.mxu0 0.0
      %935 = vmatpush1.msra.mxu0 0.0
      %936 = vmatprep.subr.mxu0 0.0
      %937 = vmatpush1.msra.mxu0 0.0
      %938 = vmatprep.subr.mxu0 0.0
      %939 = vmatpush1.msra.mxu0 0.0
      %940 = vmatprep.subr.mxu0 0.0
      %941 = vmatpush1.msra.mxu0 0.0
      %942 = vmatprep.subr.mxu0 0.0
      %943 = vmatpush1.msra.mxu0 0.0
      %944 = vmatprep.subr.mxu0 0.0
      %945 = vmatpush1.msra.mxu0 0.0
      %946 = vmatprep.subr.mxu0 0.0
      %947 = vmatpush1.msra.mxu0 0.0
      %948 = vmatprep.mubr.f32.mxu0 0.0
      %949 = vmatmul.mubr.f32.gmra.mrb[0].mxu0 %v882
      %v950 = vpop.f32.mrb[0].mxu0
      %v951 = vadd.f32 0.0, %v950
      %v952 = vpop.f32.mrb[0].mxu0
      %953 = vdwg.mxu0
      %v955 = vsel %vm880, %v877, 0
      %957 = vmatprep.subr.mxu0 0.0
      %958 = vmatpush1.msra.mxu0 %v878
      %959 = vmatprep.subr.mxu0 0.0
      %960 = vmatpush1.msra.mxu0 %v879
      %961 = vmatprep.subr.mxu0 0.0
      %962 = vmatpush1.msra.mxu0 0.0
      %963 = vmatprep.subr.mxu0 0.0
      %964 = vmatpush1.msra.mxu0 0.0
      %965 = vmatprep.subr.mxu0 0.0
      %966 = vmatpush1.msra.mxu0 0.0
      %967 = vmatprep.subr.mxu0 0.0
      %968 = vmatpush1.msra.mxu0 0.0
      %969 = vmatprep.subr.mxu0 0.0
      %970 = vmatpush1.msra.mxu0 0.0
      %971 = vmatprep.subr.mxu0 0.0
      %972 = vmatpush1.msra.mxu0 0.0
      %973 = vmatprep.subr.mxu0 0.0
      %974 = vmatpush1.msra.mxu0 0.0
      %975 = vmatprep.subr.mxu0 0.0
      %976 = vmatpush1.msra.mxu0 0.0
      %977 = vmatprep.subr.mxu0 0.0
      %978 = vmatpush1.msra.mxu0 0.0
      %979 = vmatprep.subr.mxu0 0.0
      %980 = vmatpush1.msra.mxu0 0.0
      %981 = vmatprep.subr.mxu0 0.0
      %982 = vmatpush1.msra.mxu0 0.0
      %983 = vmatprep.subr.mxu0 0.0
      %984 = vmatpush1.msra.mxu0 0.0
      %985 = vmatprep.subr.mxu0 0.0
      %986 = vmatpush1.msra.mxu0 0.0
      %987 = vmatprep.subr.mxu0 0.0
      %988 = vmatpush1.msra.mxu0 0.0
      %989 = vmatprep.subr.mxu0 0.0
      %990 = vmatpush1.msra.mxu0 0.0
      %991 = vmatprep.subr.mxu0 0.0
      %992 = vmatpush1.msra.mxu0 0.0
      %993 = vmatprep.subr.mxu0 0.0
      %994 = vmatpush1.msra.mxu0 0.0
      %995 = vmatprep.subr.mxu0 0.0
      %996 = vmatpush1.msra.mxu0 0.0
      %997 = vmatprep.subr.mxu0 0.0
      %998 = vmatpush1.msra.mxu0 0.0
      %999 = vmatprep.subr.mxu0 0.0
      %1000 = vmatpush1.msra.mxu0 0.0
      %1001 = vmatprep.subr.mxu0 0.0
      %1002 = vmatpush1.msra.mxu0 0.0
      %1003 = vmatprep.subr.mxu0 0.0
      %1004 = vmatpush1.msra.mxu0 0.0
      %1005 = vmatprep.subr.mxu0 0.0
      %1006 = vmatpush1.msra.mxu0 0.0
      %1007 = vmatprep.subr.mxu0 0.0
      %1008 = vmatpush1.msra.mxu0 0.0
      %1009 = vmatprep.subr.mxu0 0.0
      %1010 = vmatpush1.msra.mxu0 0.0
      %1011 = vmatprep.subr.mxu0 0.0
      %1012 = vmatpush1.msra.mxu0 0.0
      %1013 = vmatprep.subr.mxu0 0.0
      %1014 = vmatpush1.msra.mxu0 0.0
      %1015 = vmatprep.subr.mxu0 0.0
      %1016 = vmatpush1.msra.mxu0 0.0
      %1017 = vmatprep.subr.mxu0 0.0
      %1018 = vmatpush1.msra.mxu0 0.0
      %1019 = vmatprep.subr.mxu0 0.0
      %1020 = vmatpush1.msra.mxu0 0.0
      %1021 = vmatprep.mubr.f32.mxu0 0.0
      %1022 = vmatmul.mubr.f32.gmra.mrb[0].mxu0 %v955
      %v1023 = vpop.f32.mrb[0].mxu0
      %v1024 = vadd.f32 0.0, %v1023
      %v1025 = vpop.f32.mrb[0].mxu0
      %1026 = vdwg.mxu0
      %v1027 = vld [vmem:[%s3] sm:$0x1]
      %v1028 = vmul.f32 %v1024, %v1027
      %v1029 = vld [vmem:[%s4] sm:$0x1]
      %v1030 = vmul.f32 %v951, %v1028
      %v1031 = vsub.f32 %v1029, %v1030
      %v1032 = vlaneseq
      %v1033 = vshrl.u32 %v1032, 7
      %v1034 = vsub.s32 0, %v1033
      %v1035 = vrot.slane %v1028, %v1034
      %v1036 = vmul.f32 %v693, %v1035
      %v1037 = vmul.f32 %v696, %v1035
      %v1039 = vlaneseq
      %v1040 = vshrl.u32 %v1039, 7
      %v1041 = vsub.s32 0, %v1040
      %v1042 = vrot.slane %v1031, %v1041
      %v1044 = vadd.f32 %v1036, %v1042
      %v1045 = vadd.f32 %v1037, %v1042
      %vm1046 = vcmp.ge.f32.partialorder %v1044, 0.0
      %vm1047 = vcmp.ge.f32.partialorder %v1045, 0.0
      %v1048 = vmul.f32 %v1044, 0.2
      %v1049 = vmul.f32 %v1045, 0.2
      %v1050 = vsel %vm1046, %v1044, %v1048
      %v1051 = vsel %vm1047, %v1045, %v1049
      %v1052 = vld [vmem:[%s7] sm:$0xff]
      %v1053 = vld [vmem:[%s7 + $0x8] sm:$0xff]
      %v1054 = vmul.f32 %v1050, %v1052
      %v1055 = vmul.f32 %v1051, %v1053
      %v1056 = vadd.f32 %v1054, %v1055
      %v1057 = vrot.slane %v1056, 4
      %v1058 = vadd.f32 %v1056, %v1057
      %v1059 = vrot.slane %v1058, 2
      %v1060 = vadd.f32 %v1058, %v1059
      %v1061 = vrot.slane %v1060, 1
      %v1062 = vadd.f32 %v1060, %v1061
      %1063 = vadd.xlane.f32.xlu0 %v1062
      %v1064 = vpop.xlane.xlu0 %1063
      %v1065 = vld [vmem:[%s8] sm:$0x1]
      %v1066 = vadd.f32 %v1064, %v1065
      %1067 = vst [vmem:[%s328] sm:$0x1] %v1066
      %p1068 = scmp.lt.s32.totalorder %s20, 1
      %s1069 = scalar_select %p1068, %s20, 1
      %s1070 = scalar_lea.vmem %s9, %s1069
      // Predicated region
      $region57: #{discriminator_forward.3} parent=55 // pred_check
        %p1071 = pneg %p232
      $region58: #{discriminator_forward.3} parent=55 // pred_check_branch
        %1073 = sbr.rel (%p1071) target = $region60
      $region59: #{discriminator_forward.3} parent=55 // pred_region
        _
      $region60: #{discriminator_forward.3} parent=55 // pred_fallthru
        _
    $region56: #{discriminator_forward.3} parent=5 // pred_fallthru
      _
    %p1074 = scmp.le.s32.totalorder 2, %s15
    // Predicated region
    $region61: #{discriminator_forward.3} parent=5 // pred_check
      %p1075 = pneg %p1074
    $region62: #{discriminator_forward.3} parent=5 // pred_check_branch
      %1077 = sbr.rel (%p1075) target = $region64
    $region63: #{discriminator_forward.3} parent=5 // pred_region
      %s1078 = ssub.s32 %s15, 2
      // Predicated region
      $region65: #{discriminator_forward.3} parent=63 // pred_check
        %p1079 = pneg %p238
      $region66: #{discriminator_forward.3} parent=63 // pred_check_branch
        %1081 = sbr.rel (%p1079) target = $region68
      $region67: #{discriminator_forward.3} parent=63 // pred_region
        %p1082 = scmp.lt.s32.totalorder %s21, 1
        %s1083 = scalar_select %p1082, %s21, 1
        %s1084 = scalar_lea.vmem %s9, %s1083
      $region68: #{discriminator_forward.3} parent=63 // pred_fallthru
        _
    $region64: #{discriminator_forward.3} parent=5 // pred_fallthru
      _
  $region6: #{discriminator_forward.3} parent=0 // loop_footer
    %s19 = sadd.s32 1, %s15
  $region7: #{discriminator_forward.3} parent=0 // loop_footer_branch
    %14 = sbr.rel target = $region3
  $region8: #{discriminator_forward.3} parent=0 // loop_exit
    _

</llo_original>
